<compile_context>
chip_gen: v7x
topology: tpu7x:2x2x1
jax: 0.10.0
libtpu: 0.0.40
codegen_flags: <defaults>
</compile_context>

<pallas_src>
import jax
import jax.numpy as jnp
from jax.experimental import pallas as pl
from jax.experimental.pallas import tpu as pltpu

# ----------------------------- model hyper-params -----------------------------
N_CLASSES   = 4
N_MELS      = 8
SAMPLE_RATE = 16
N_POINTS    = 16
HOP_LENGTH  = 2
HIDDEN      = 32                                  # fixed in the module
N_TIME      = N_POINTS // HOP_LENGTH + 1          # 9
N_FREQ_SPEC = N_POINTS // 2 + 1                   # 9 (rfft bins)
KSIZE       = 5
INIT_LAMBD  = 4.0

HW      = N_MELS * N_TIME                         # 72  (conv spatial, (m, t) order)
N_SPEC  = N_TIME * N_FREQ_SPEC                    # 81  ((t, f) order)
N_REIM  = 2 * N_SPEC                              # 162 ([re | im])
N_FEAT  = HIDDEN * HW                             # 2304 ((c, h, w) flatten)

# Lane-dense padded widths (every matmul N dim and every HBM store is a
# multiple of 128 lanes; padding is zeros so the math is unchanged).
REIM_PAD = 256                                    # 162 -> 256
MEL_PAD  = 128                                    # 72  -> 128
HID_PAD  = 128                                    # 32  -> 128
CLS_PAD  = 128                                    # 4   -> 128


# ========================= static (param-independent) constants ==============

def _melscale_fbanks_htk(n_freqs, f_min, f_max, n_mels, sample_rate):
    """torchaudio.functional.melscale_fbanks defaults (HTK scale, norm=None)."""
    all_freqs = jnp.linspace(0.0, float(sample_rate // 2), n_freqs)

    def hz_to_mel(f):
        return 2595.0 * jnp.log10(1.0 + f / 700.0)

    def mel_to_hz(m):
        return 700.0 * (10.0 ** (m / 2595.0) - 1.0)

    m_min = hz_to_mel(jnp.asarray(f_min, jnp.float32))
    m_max = hz_to_mel(jnp.asarray(f_max, jnp.float32))
    m_pts = jnp.linspace(m_min, m_max, n_mels + 2)
    f_pts = mel_to_hz(m_pts)
    f_diff = f_pts[1:] - f_pts[:-1]
    slopes = f_pts[None, :] - all_freqs[:, None]
    down = -slopes[:, :-2] / f_diff[:-1]
    up = slopes[:, 2:] / f_diff[1:]
    return jnp.maximum(0.0, jnp.minimum(down, up)).astype(jnp.float32)  # (n_freqs, n_mels)


def _build_static_constants():
    # DFT real / imag matrices, (n_points, n_freq) each.
    n = jnp.arange(N_POINTS, dtype=jnp.float32)
    f = jnp.arange(N_FREQ_SPEC, dtype=jnp.float32)
    ang = 2.0 * jnp.pi * n[:, None] * f[None, :] / N_POINTS
    dft_stack = jnp.stack([jnp.cos(ang), -jnp.sin(ang)], axis=0)        # (2, n, f)

    # Mel projection fused with the re^2 + im^2 reduction:
    # fb2[(p, t, f), (m, t')] = fb[f, m] * (t == t'), p in {re, im}.
    fb = _melscale_fbanks_htk(N_FREQ_SPEC, 0.0, SAMPLE_RATE // 2, N_MELS, SAMPLE_RATE)
    fbh = jnp.einsum("fm,tu->tfmu", fb, jnp.eye(N_TIME, dtype=jnp.float32))
    fbh = fbh.reshape(N_SPEC, HW)                                       # (81, 72)
    fb2 = jnp.concatenate([fbh, fbh], axis=0)                           # (162, 72)
    # Zero-pad: rows 162->256 (matches padded wmat cols), cols 72->128
    # (lane-dense mel / `s` output).
    fb2 = jnp.pad(fb2, ((0, REIM_PAD - N_REIM), (0, MEL_PAD - HW)))     # (256, 128)

    # Gather indices / mask for composing the 5x5 'same' conv into a dense op.
    hi = jnp.arange(N_MELS); ho = jnp.arange(N_MELS)
    wi = jnp.arange(N_TIME); wo = jnp.arange(N_TIME)
    dh = hi[:, None] - ho[None, :] + KSIZE // 2                         # (8, 8)
    dw = wi[:, None] - wo[None, :] + KSIZE // 2                         # (9, 9)
    mask = (((dh >= 0) & (dh < KSIZE))[:, :, None, None]
            & ((dw >= 0) & (dw < KSIZE))[None, None, :, :])             # (8, 8, 9, 9)
    kh = jnp.clip(dh, 0, KSIZE - 1)
    kw = jnp.clip(dw, 0, KSIZE - 1)
    return dft_stack, fb2, mask, kh, kw


_DFT_STACK, _FB2_PAD, _CONV_MASK, _CONV_KH, _CONV_KW = _build_static_constants()


# ========================= param-dependent operator builders =================

def _gaussian_windows(lambd):
    n = jnp.arange(N_POINTS, dtype=jnp.float32)
    centers = jnp.arange(N_TIME, dtype=jnp.float32) * HOP_LENGTH
    sigma = jnp.abs(lambd)                                              # torch.abs(self.lambd)
    return jnp.exp(-0.5 * ((n[None, :] - centers[:, None]) / sigma) ** 2)  # (t, n)


def _build_wmat(lambd):
    """Windowed-DFT operator: (n_points, REIM_PAD), cols (p, t, f) + zero pad.

    Per-sample mean-centering is precomposed into the operator:
    (x - mean(x)) @ W == x @ (W - colmean(W)).
    """
    win = _gaussian_windows(lambd)                                      # (t, n)
    w4 = win[None, :, :, None] * _DFT_STACK[:, None, :, :]              # (p, t, n, f)
    wmat = w4.transpose(2, 0, 1, 3).reshape(N_POINTS, N_REIM)           # (n, p*t*f)
    wmat = wmat - jnp.mean(wmat, axis=0, keepdims=True)                 # fold centering
    return jnp.pad(wmat, ((0, 0), (0, REIM_PAD - N_REIM)))              # (16, 256)


def _build_conv_operator(conv_w, conv_b):
    """Conv2d(1, HIDDEN, 5, padding='same') on an (8, 9) plane as a dense
    (MEL_PAD, N_FEAT) bf16 operator; columns in (C, H, W) flatten order
    (matches torch x.view(-1, hidden * n_mels * n_time))."""
    cw = conv_w[:, 0]                                                   # (32, 5, 5)
    g = cw[:, _CONV_KH[:, :, None, None], _CONV_KW[None, None, :, :]]   # (32, 8, 8, 9, 9)
    g = jnp.where(_CONV_MASK[None], g, 0.0)
    cmat = g.transpose(1, 3, 0, 2, 4).reshape(HW, N_FEAT)               # (72, 2304)
    cmat = jnp.pad(cmat, ((0, MEL_PAD - HW), (0, 0)))                   # (128, 2304)
    cb = jnp.repeat(conv_b, HW).reshape(1, N_FEAT).astype(jnp.float32)  # bias per (c, h, w)
    return cmat.astype(jnp.bfloat16), cb


# ================================ fused kernel ================================

def _fused_forward_kernel(x_ref, wmat_ref, fb2_ref, cmat_ref, cb_ref,
                          w1_ref, b1_ref, w2_ref, b2_ref,
                          s_ref, logits_ref):
    # x_ref   : (BT, n_points) f32     batch tile of waveforms
    # wmat_ref: (n_points, 256) f32    centered windowed DFT ([re | im], zero-padded)
    # fb2_ref : (256, 128) f32         |.|^2 -> mel projection, cols (m, t) + zero pad
    # cmat_ref: (128, 2304) bf16       conv-as-matmul operator, cols (c, h, w)
    # cb_ref  : (1, 2304) f32          conv bias broadcast over spatial positions
    # w1/b1   : (2304, 128) bf16 / (1, 128) f32   fc1 (cols 32..127 zero)
    # w2/b2   : (128, 128) f32 / (1, 128) f32     fc2 (rows 32.. / cols 4.. zero)
    # s_ref   : (BT, 128) f32          mel spectrogram, (m, t) flatten in cols 0..71
    # logits  : (BT, 128) f32          logits in cols 0..3
    x = x_ref[...]

    # --- spectrogram stage, all f32 (tiny FLOPs, precision-sensitive power) ---
    reim = jnp.dot(x, wmat_ref[...], preferred_element_type=jnp.float32)    # (BT, 256)
    sq = reim * reim                                                        # VPU, f32
    mel = jnp.dot(sq, fb2_ref[...], preferred_element_type=jnp.float32)     # (BT, 128)
    s_ref[...] = mel                                                        # lane-dense store

    # --- Conv2d(1, 32, 5, 'same') + ReLU as one matmul (bf16 MXU, f32 acc) ---
    conv = jnp.dot(mel.astype(jnp.bfloat16), cmat_ref[...],
                   preferred_element_type=jnp.float32) + cb_ref[...]        # (BT, 2304) f32
    conv = jnp.maximum(conv, 0.0)

    # --- fc1 (bf16 MXU, f32 acc) -> ReLU -> fc2 (tiny, f32) ---
    h1 = jnp.dot(conv.astype(jnp.bfloat16), w1_ref[...],
                 preferred_element_type=jnp.float32) + b1_ref[...]          # (BT, 128) f32
    h1 = jnp.maximum(h1, 0.0)
    logits_ref[...] = jnp.dot(h1, w2_ref[...],
                              preferred_element_type=jnp.float32) + b2_ref[...]


# ================================ glue (JAX) ==================================

def _round_up(v, m):
    return (v + m - 1) // m * m


def _choose_batch_tile(B, batch_tile):
    if B <= batch_tile:
        return _round_up(B, 8)                     # small batch: sublane-aligned
    bt = max(128, _round_up(batch_tile, 128))      # MXU M-dim / 128-aligned
    # Prefer an even tile count (> 1) so v7x's two TensorCores both get work.
    while bt > 128 and (_round_up(B, bt) // bt) % 2 == 1:
        bt -= 128
    return bt


def mel_conv_net_forward(x, params, *, batch_tile=512):
    B = x.shape[0]
    bt = _choose_batch_tile(B, batch_tile)
    b_pad = _round_up(B, bt)
    if b_pad != B:
        x = jnp.pad(x, ((0, b_pad - B), (0, 0)))
    num_tiles = b_pad // bt

    wmat = _build_wmat(params["lambd"])                                  # (16, 256) f32
    cmat, cb = _build_conv_operator(params["conv_w"], params["conv_b"])  # bf16 / f32
    w1 = jnp.pad(params["fc1_w"].T, ((0, 0), (0, HID_PAD - HIDDEN))).astype(jnp.bfloat16)
    b1 = jnp.pad(params["fc1_b"].reshape(1, HIDDEN),
                 ((0, 0), (0, HID_PAD - HIDDEN))).astype(jnp.float32)
    w2 = jnp.pad(params["fc2_w"].T,
                 ((0, HID_PAD - HIDDEN), (0, CLS_PAD - N_CLASSES))).astype(jnp.float32)
    b2 = jnp.pad(params["fc2_b"].reshape(1, N_CLASSES),
                 ((0, 0), (0, CLS_PAD - N_CLASSES))).astype(jnp.float32)

    const = lambda i: (0, 0)                       # constants stay VMEM-resident
    s_flat, logits = pl.pallas_call(
        _fused_forward_kernel,
        out_shape=(jax.ShapeDtypeStruct((b_pad, MEL_PAD), jnp.float32),
                   jax.ShapeDtypeStruct((b_pad, CLS_PAD), jnp.float32)),
        grid=(num_tiles,),
        in_specs=[
            pl.BlockSpec((bt, N_POINTS), lambda i: (i, 0)),
            pl.BlockSpec((N_POINTS, REIM_PAD), const),
            pl.BlockSpec((REIM_PAD, MEL_PAD), const),
            pl.BlockSpec((MEL_PAD, N_FEAT), const),
            pl.BlockSpec((1, N_FEAT), const),
            pl.BlockSpec((N_FEAT, HID_PAD), const),
            pl.BlockSpec((1, HID_PAD), const),
            pl.BlockSpec((HID_PAD, CLS_PAD), const),
            pl.BlockSpec((1, CLS_PAD), const),
        ],
        out_specs=(
            pl.BlockSpec((bt, MEL_PAD), lambda i: (i, 0)),
            pl.BlockSpec((bt, CLS_PAD), lambda i: (i, 0)),
        ),
        compiler_params=pltpu.CompilerParams(
            dimension_semantics=("parallel",),      # v7x: both TCs get batch tiles
            vmem_limit_bytes=48 * 1024 * 1024,      # past 16/32 MiB scoped defaults,
        ),                                          # under v7x's 64 MiB physical
    )(x, wmat, _FB2_PAD, cmat, cb, w1, b1, w2, b2)

    s = s_flat[:B, :HW].reshape(B, 1, N_MELS, N_TIME)   # NCHW mel spectrogram
    logits = logits[:B, :N_CLASSES]
    return logits, s


# ============================= parameter init =================================

def init_params(key):
    k1, k2, k3, k4, k5, k6 = jax.random.split(key, 6)
    fan_conv = 1 * KSIZE * KSIZE
    fan_fc1 = HIDDEN * N_MELS * N_TIME
    fan_fc2 = HIDDEN

    def u(k, shape, fan):
        bound = 1.0 / float(fan) ** 0.5
        return jax.random.uniform(k, shape, jnp.float32, -bound, bound)

    return {
        "lambd":  jnp.float32(INIT_LAMBD),
        "conv_w": u(k1, (HIDDEN, 1, KSIZE, KSIZE), fan_conv),
        "conv_b": u(k2, (HIDDEN,), fan_conv),
        "fc1_w":  u(k3, (HIDDEN, fan_fc1), fan_fc1),
        "fc1_b":  u(k4, (HIDDEN,), fan_fc1),
        "fc2_w":  u(k5, (N_CLASSES, HIDDEN), fan_fc2),
        "fc2_b":  u(k6, (N_CLASSES,), fan_fc2),
    }


if __name__ == "__main__":
    key = jax.random.PRNGKey(0)
    kp, kx = jax.random.split(key)
    params = init_params(kp)
    x = jax.random.normal(kx, (2, N_POINTS), jnp.float32)

    logits, s = jax.jit(mel_conv_net_forward)(x, params)
    jax.block_until_ready((logits, s))

    assert logits.shape == (2, N_CLASSES), logits.shape
    assert s.shape == (2, 1, N_MELS, N_TIME), s.shape
    assert bool(jnp.all(jnp.isfinite(logits))) and bool(jnp.all(jnp.isfinite(s)))
    print("KERNEL_OK")
</pallas_src>

<mosaic_0001>
module attributes {stable_mosaic.version = 11 : i64} {
  func.func @_fused_forward_kernel(%arg0: i32, %arg1: memref<8x16xf32, #tpu.memory_space<vmem>>, %arg2: memref<16x256xf32, #tpu.memory_space<vmem>>, %arg3: memref<256x128xf32, #tpu.memory_space<vmem>>, %arg4: memref<128x2304xbf16, #tpu.memory_space<vmem>>, %arg5: memref<1x2304xf32, #tpu.memory_space<vmem>>, %arg6: memref<2304x128xbf16, #tpu.memory_space<vmem>>, %arg7: memref<1x128xf32, #tpu.memory_space<vmem>>, %arg8: memref<128x128xf32, #tpu.memory_space<vmem>>, %arg9: memref<1x128xf32, #tpu.memory_space<vmem>>, %arg10: memref<8x128xf32, #tpu.memory_space<vmem>>, %arg11: memref<8x128xf32, #tpu.memory_space<vmem>>) attributes {dimension_semantics = [#tpu.dimension_semantics<parallel>], iteration_bounds = array<i64: 1>, scalar_prefetch = 0 : i64, scratch_operands = 0 : i64, tpu.core_type = #tpu.core_type<tc>, window_params = [{transform_indices = @transform_0, window_bounds = array<i64: 8, 16>}, {pipeline_mode = #tpu.pipeline_mode<synchronous>, transform_indices = @transform_1, window_bounds = array<i64: 16, 256>}, {pipeline_mode = #tpu.pipeline_mode<synchronous>, transform_indices = @transform_2, window_bounds = array<i64: 256, 128>}, {pipeline_mode = #tpu.pipeline_mode<synchronous>, transform_indices = @transform_3, window_bounds = array<i64: 128, 2304>}, {pipeline_mode = #tpu.pipeline_mode<synchronous>, transform_indices = @transform_4, window_bounds = array<i64: 1, 2304>}, {pipeline_mode = #tpu.pipeline_mode<synchronous>, transform_indices = @transform_5, window_bounds = array<i64: 2304, 128>}, {pipeline_mode = #tpu.pipeline_mode<synchronous>, transform_indices = @transform_6, window_bounds = array<i64: 1, 128>}, {pipeline_mode = #tpu.pipeline_mode<synchronous>, transform_indices = @transform_7, window_bounds = array<i64: 128, 128>}, {pipeline_mode = #tpu.pipeline_mode<synchronous>, transform_indices = @transform_8, window_bounds = array<i64: 1, 128>}, {transform_indices = @transform_9, window_bounds = array<i64: 8, 128>}, {transform_indices = @transform_10, window_bounds = array<i64: 8, 128>}]} {
    %c0 = arith.constant 0 : index
    %c0_0 = arith.constant 0 : index
    %0 = vector.load %arg1[%c0, %c0_0] : memref<8x16xf32, #tpu.memory_space<vmem>>, vector<8x16xf32>
    %c0_1 = arith.constant 0 : index
    %c0_2 = arith.constant 0 : index
    %1 = vector.load %arg2[%c0_1, %c0_2] : memref<16x256xf32, #tpu.memory_space<vmem>>, vector<16x256xf32>
    %cst = arith.constant dense<0.000000e+00> : vector<8x256xf32>
    %2 = tpu.matmul %0, %1, %cst {dimension_numbers = #tpu.dot_dimension_numbers<[1], [0], [0], [1], [0, 0, 1, 1], [], []>} : vector<8x16xf32>, vector<16x256xf32>, vector<8x256xf32> -> vector<8x256xf32>
    %3 = arith.mulf %2, %2 : vector<8x256xf32>
    %c0_3 = arith.constant 0 : index
    %c0_4 = arith.constant 0 : index
    %4 = vector.load %arg3[%c0_3, %c0_4] : memref<256x128xf32, #tpu.memory_space<vmem>>, vector<256x128xf32>
    %cst_5 = arith.constant dense<0.000000e+00> : vector<8x128xf32>
    %5 = tpu.matmul %3, %4, %cst_5 {dimension_numbers = #tpu.dot_dimension_numbers<[1], [0], [0], [1], [0, 0, 1, 1], [], []>} : vector<8x256xf32>, vector<256x128xf32>, vector<8x128xf32> -> vector<8x128xf32>
    %c0_6 = arith.constant 0 : index
    %c0_7 = arith.constant 0 : index
    %6 = vector.load %arg10[%c0_6, %c0_7] : memref<8x128xf32, #tpu.memory_space<vmem>>, vector<8x128xf32>
    tpu.vector_store %arg10[%c0_6, %c0_7], %5 {strides = array<i32>} : memref<8x128xf32, #tpu.memory_space<vmem>>, vector<8x128xf32>,
    %7 = arith.truncf %5 : vector<8x128xf32> to vector<8x128xbf16>
    %c0_8 = arith.constant 0 : index
    %c0_9 = arith.constant 0 : index
    %8 = vector.load %arg4[%c0_8, %c0_9] : memref<128x2304xbf16, #tpu.memory_space<vmem>>, vector<128x2304xbf16>
    %cst_10 = arith.constant dense<0.000000e+00> : vector<8x2304xf32>
    %9 = tpu.matmul %7, %8, %cst_10 {dimension_numbers = #tpu.dot_dimension_numbers<[1], [0], [0], [1], [0, 0, 1, 1], [], []>} : vector<8x128xbf16>, vector<128x2304xbf16>, vector<8x2304xf32> -> vector<8x2304xf32>
    %c0_11 = arith.constant 0 : index
    %c0_12 = arith.constant 0 : index
    %10 = vector.load %arg5[%c0_11, %c0_12] : memref<1x2304xf32, #tpu.memory_space<vmem>>, vector<1x2304xf32>
    %11 = vector.broadcast %10 : vector<1x2304xf32> to vector<8x2304xf32>
    %12 = arith.addf %9, %11 : vector<8x2304xf32>
    %cst_13 = arith.constant 0.000000e+00 : f32
    %13 = vector.broadcast %cst_13 : f32 to vector<8x2304xf32>
    %14 = arith.maximumf %12, %13 : vector<8x2304xf32>
    %15 = arith.truncf %14 : vector<8x2304xf32> to vector<8x2304xbf16>
    %c0_14 = arith.constant 0 : index
    %c0_15 = arith.constant 0 : index
    %16 = vector.load %arg6[%c0_14, %c0_15] : memref<2304x128xbf16, #tpu.memory_space<vmem>>, vector<2304x128xbf16>
    %cst_16 = arith.constant dense<0.000000e+00> : vector<8x128xf32>
    %17 = tpu.matmul %15, %16, %cst_16 {dimension_numbers = #tpu.dot_dimension_numbers<[1], [0], [0], [1], [0, 0, 1, 1], [], []>} : vector<8x2304xbf16>, vector<2304x128xbf16>, vector<8x128xf32> -> vector<8x128xf32>
    %c0_17 = arith.constant 0 : index
    %c0_18 = arith.constant 0 : index
    %18 = vector.load %arg7[%c0_17, %c0_18] : memref<1x128xf32, #tpu.memory_space<vmem>>, vector<1x128xf32>
    %19 = vector.broadcast %18 : vector<1x128xf32> to vector<8x128xf32>
    %20 = arith.addf %17, %19 : vector<8x128xf32>
    %cst_19 = arith.constant 0.000000e+00 : f32
    %21 = vector.broadcast %cst_19 : f32 to vector<8x128xf32>
    %22 = arith.maximumf %20, %21 : vector<8x128xf32>
    %c0_20 = arith.constant 0 : index
    %c0_21 = arith.constant 0 : index
    %23 = vector.load %arg8[%c0_20, %c0_21] : memref<128x128xf32, #tpu.memory_space<vmem>>, vector<128x128xf32>
    %cst_22 = arith.constant dense<0.000000e+00> : vector<8x128xf32>
    %24 = tpu.matmul %22, %23, %cst_22 {dimension_numbers = #tpu.dot_dimension_numbers<[1], [0], [0], [1], [0, 0, 1, 1], [], []>} : vector<8x128xf32>, vector<128x128xf32>, vector<8x128xf32> -> vector<8x128xf32>
    %c0_23 = arith.constant 0 : index
    %c0_24 = arith.constant 0 : index
    %25 = vector.load %arg9[%c0_23, %c0_24] : memref<1x128xf32, #tpu.memory_space<vmem>>, vector<1x128xf32>
    %26 = vector.broadcast %25 : vector<1x128xf32> to vector<8x128xf32>
    %27 = arith.addf %24, %26 : vector<8x128xf32>
    %c0_25 = arith.constant 0 : index
    %c0_26 = arith.constant 0 : index
    %28 = vector.load %arg11[%c0_25, %c0_26] : memref<8x128xf32, #tpu.memory_space<vmem>>, vector<8x128xf32>
    tpu.vector_store %arg11[%c0_25, %c0_26], %27 {strides = array<i32>} : memref<8x128xf32, #tpu.memory_space<vmem>>, vector<8x128xf32>,
    return
  }
  func.func @transform_0(%arg0: i32) -> (i32, i32) {
    %c0_i32 = arith.constant 0 : i32
    %c0_i32_0 = arith.constant 0 : i32
    return %arg0, %c0_i32 : i32, i32
  }
  func.func @transform_1(%arg0: i32) -> (i32, i32) {
    %c0_i32 = arith.constant 0 : i32
    %c0_i32_0 = arith.constant 0 : i32
    %c0_i32_1 = arith.constant 0 : i32
    return %c0_i32, %c0_i32_0 : i32, i32
  }
  func.func @transform_2(%arg0: i32) -> (i32, i32) {
    %c0_i32 = arith.constant 0 : i32
    %c0_i32_0 = arith.constant 0 : i32
    %c0_i32_1 = arith.constant 0 : i32
    return %c0_i32, %c0_i32_0 : i32, i32
  }
  func.func @transform_3(%arg0: i32) -> (i32, i32) {
    %c0_i32 = arith.constant 0 : i32
    %c0_i32_0 = arith.constant 0 : i32
    %c0_i32_1 = arith.constant 0 : i32
    return %c0_i32, %c0_i32_0 : i32, i32
  }
  func.func @transform_4(%arg0: i32) -> (i32, i32) {
    %c0_i32 = arith.constant 0 : i32
    %c0_i32_0 = arith.constant 0 : i32
    %c0_i32_1 = arith.constant 0 : i32
    return %c0_i32, %c0_i32_0 : i32, i32
  }
  func.func @transform_5(%arg0: i32) -> (i32, i32) {
    %c0_i32 = arith.constant 0 : i32
    %c0_i32_0 = arith.constant 0 : i32
    %c0_i32_1 = arith.constant 0 : i32
    return %c0_i32, %c0_i32_0 : i32, i32
  }
  func.func @transform_6(%arg0: i32) -> (i32, i32) {
    %c0_i32 = arith.constant 0 : i32
    %c0_i32_0 = arith.constant 0 : i32
    %c0_i32_1 = arith.constant 0 : i32
    return %c0_i32, %c0_i32_0 : i32, i32
  }
  func.func @transform_7(%arg0: i32) -> (i32, i32) {
    %c0_i32 = arith.constant 0 : i32
    %c0_i32_0 = arith.constant 0 : i32
    %c0_i32_1 = arith.constant 0 : i32
    return %c0_i32, %c0_i32_0 : i32, i32
  }
  func.func @transform_8(%arg0: i32) -> (i32, i32) {
    %c0_i32 = arith.constant 0 : i32
    %c0_i32_0 = arith.constant 0 : i32
    %c0_i32_1 = arith.constant 0 : i32
    return %c0_i32, %c0_i32_0 : i32, i32
  }
  func.func @transform_9(%arg0: i32) -> (i32, i32) {
    %c0_i32 = arith.constant 0 : i32
    %c0_i32_0 = arith.constant 0 : i32
    return %arg0, %c0_i32 : i32, i32
  }
  func.func @transform_10(%arg0: i32) -> (i32, i32) {
    %c0_i32 = arith.constant 0 : i32
    %c0_i32_0 = arith.constant 0 : i32
    return %arg0, %c0_i32 : i32, i32
  }
}

</mosaic_0001>

<llo_original>
// kernel: mel_conv_net_forward.1
$region0: #{mel_conv_net_forward.1}
  #allocation0 [shape = 'u32[]', space=smem, size = 0x4, offset = 0x4, fixed_abs, tag = 'smem constant byte address 0x4 - core index']
  #allocation1 [shape = 'u32[144,128]{1,0:T(1,128)}', space=vmem, size = 0x12000, scoped, tag = 'internal scratch']
  %s0 = inlined_call_operand.vmem [shape: f32[8,16], index: 0, kind: input, shape index: {}]
  %s1 = inlined_call_operand.vmem [shape: f32[16,256], index: 1, kind: input, shape index: {}]
  %s2 = inlined_call_operand.vmem [shape: f32[256,128], index: 2, kind: input, shape index: {}]
  %s3 = inlined_call_operand.vmem [shape: bf16[128,2304], index: 3, kind: input, shape index: {}]
  %s4 = inlined_call_operand.vmem [shape: f32[1,2304], index: 4, kind: input, shape index: {}]
  %s5 = inlined_call_operand.vmem [shape: bf16[2304,128], index: 5, kind: input, shape index: {}]
  %s6 = inlined_call_operand.vmem [shape: f32[1,128], index: 6, kind: input, shape index: {}]
  %s7 = inlined_call_operand.vmem [shape: f32[128,128], index: 7, kind: input, shape index: {}]
  %s8 = inlined_call_operand.vmem [shape: f32[1,128], index: 8, kind: input, shape index: {}]
  %s9 = inlined_call_operand.vmem [shape: f32[8,128], index: 9, kind: output, shape index: {0}]
  %s10 = inlined_call_operand.vmem [shape: f32[8,128], index: 10, kind: output, shape index: {1}]
  %11 = xla_tuple %s9, %s10
  %s12 = sld [smem:[#allocation0]]
  $region54: #{mel_conv_net_forward.1} parent=0
    _
  %s14 = ssub.s32 1, %s12
  %s15 = scalar_select 0, %s14, %s12
  // Predicated region
  $region2: #{mel_conv_net_forward.1} parent=0 // pred_check
    _
  $region3: #{mel_conv_net_forward.1} parent=0 // pred_check_branch
    %17 = sbr.rel (0) target = $region5
  $region4: #{mel_conv_net_forward.1} parent=0 // pred_region
    _
  $region5: #{mel_conv_net_forward.1} parent=0 // pred_fallthru
    _
  // Predicated region
  $region6: #{mel_conv_net_forward.1} parent=0 // pred_check
    _
  $region7: #{mel_conv_net_forward.1} parent=0 // pred_check_branch
    %19 = sbr.rel (0) target = $region9
  $region8: #{mel_conv_net_forward.1} parent=0 // pred_region
    _
  $region9: #{mel_conv_net_forward.1} parent=0 // pred_fallthru
    _
  // Predicated region
  $region10: #{mel_conv_net_forward.1} parent=0 // pred_check
    _
  $region11: #{mel_conv_net_forward.1} parent=0 // pred_check_branch
    %21 = sbr.rel (0) target = $region13
  $region12: #{mel_conv_net_forward.1} parent=0 // pred_region
    _
  $region13: #{mel_conv_net_forward.1} parent=0 // pred_fallthru
    _
  // Predicated region
  $region14: #{mel_conv_net_forward.1} parent=0 // pred_check
    _
  $region15: #{mel_conv_net_forward.1} parent=0 // pred_check_branch
    %23 = sbr.rel (0) target = $region17
  $region16: #{mel_conv_net_forward.1} parent=0 // pred_region
    _
  $region17: #{mel_conv_net_forward.1} parent=0 // pred_fallthru
    _
  // Predicated region
  $region18: #{mel_conv_net_forward.1} parent=0 // pred_check
    _
  $region19: #{mel_conv_net_forward.1} parent=0 // pred_check_branch
    %25 = sbr.rel (0) target = $region21
  $region20: #{mel_conv_net_forward.1} parent=0 // pred_region
    _
  $region21: #{mel_conv_net_forward.1} parent=0 // pred_fallthru
    _
  // Predicated region
  $region22: #{mel_conv_net_forward.1} parent=0 // pred_check
    _
  $region23: #{mel_conv_net_forward.1} parent=0 // pred_check_branch
    %27 = sbr.rel (0) target = $region25
  $region24: #{mel_conv_net_forward.1} parent=0 // pred_region
    _
  $region25: #{mel_conv_net_forward.1} parent=0 // pred_fallthru
    _
  // Predicated region
  $region26: #{mel_conv_net_forward.1} parent=0 // pred_check
    _
  $region27: #{mel_conv_net_forward.1} parent=0 // pred_check_branch
    %29 = sbr.rel (0) target = $region29
  $region28: #{mel_conv_net_forward.1} parent=0 // pred_region
    _
  $region29: #{mel_conv_net_forward.1} parent=0 // pred_fallthru
    _
  // Predicated region
  $region30: #{mel_conv_net_forward.1} parent=0 // pred_check
    _
  $region31: #{mel_conv_net_forward.1} parent=0 // pred_check_branch
    %31 = sbr.rel (0) target = $region33
  $region32: #{mel_conv_net_forward.1} parent=0 // pred_region
    _
  $region33: #{mel_conv_net_forward.1} parent=0 // pred_fallthru
    _
  // Predicated region
  $region34: #{mel_conv_net_forward.1} parent=0 // pred_check
    _
  $region35: #{mel_conv_net_forward.1} parent=0 // pred_check_branch
    %33 = sbr.rel (0) target = $region37
  $region36: #{mel_conv_net_forward.1} parent=0 // pred_region
    _
  $region37: #{mel_conv_net_forward.1} parent=0 // pred_fallthru
    _
  %v35 = vld [vmem:[%s0] sm:$0xff]
  %v36 = vld [vmem:[%s1] sm:$0xff]
  %v37 = vld [vmem:[%s1 + $0x8] sm:$0xff]
  %v38 = vld [vmem:[%s1 + $0x10] sm:$0xff]
  %v39 = vld [vmem:[%s1 + $0x18] sm:$0xff]
  %vm40 = vcmask 130048
  %v42 = vsel %vm40, %v35, 0
  %44 = vmatprep.subr.mxu0 %v37
  %45 = vmatpush1.msra.mxu0 %v36
  %46 = vmatprep.subr.mxu0 %v39
  %47 = vmatpush1.msra.mxu0 %v38
  %48 = vmatprep.subr.mxu0 0.0
  %49 = vmatpush1.msra.mxu0 0.0
  %50 = vmatprep.subr.mxu0 0.0
  %51 = vmatpush1.msra.mxu0 0.0
  %52 = vmatprep.subr.mxu0 0.0
  %53 = vmatpush1.msra.mxu0 0.0
  %54 = vmatprep.subr.mxu0 0.0
  %55 = vmatpush1.msra.mxu0 0.0
  %56 = vmatprep.subr.mxu0 0.0
  %57 = vmatpush1.msra.mxu0 0.0
  %58 = vmatprep.subr.mxu0 0.0
  %59 = vmatpush1.msra.mxu0 0.0
  %60 = vmatprep.subr.mxu0 0.0
  %61 = vmatpush1.msra.mxu0 0.0
  %62 = vmatprep.subr.mxu0 0.0
  %63 = vmatpush1.msra.mxu0 0.0
  %64 = vmatprep.subr.mxu0 0.0
  %65 = vmatpush1.msra.mxu0 0.0
  %66 = vmatprep.subr.mxu0 0.0
  %67 = vmatpush1.msra.mxu0 0.0
  %68 = vmatprep.subr.mxu0 0.0
  %69 = vmatpush1.msra.mxu0 0.0
  %70 = vmatprep.subr.mxu0 0.0
  %71 = vmatpush1.msra.mxu0 0.0
  %72 = vmatprep.subr.mxu0 0.0
  %73 = vmatpush1.msra.mxu0 0.0
  %74 = vmatprep.subr.mxu0 0.0
  %75 = vmatpush1.msra.mxu0 0.0
  %76 = vmatprep.subr.mxu0 0.0
  %77 = vmatpush1.msra.mxu0 0.0
  %78 = vmatprep.subr.mxu0 0.0
  %79 = vmatpush1.msra.mxu0 0.0
  %80 = vmatprep.subr.mxu0 0.0
  %81 = vmatpush1.msra.mxu0 0.0
  %82 = vmatprep.subr.mxu0 0.0
  %83 = vmatpush1.msra.mxu0 0.0
  %84 = vmatprep.subr.mxu0 0.0
  %85 = vmatpush1.msra.mxu0 0.0
  %86 = vmatprep.subr.mxu0 0.0
  %87 = vmatpush1.msra.mxu0 0.0
  %88 = vmatprep.subr.mxu0 0.0
  %89 = vmatpush1.msra.mxu0 0.0
  %90 = vmatprep.subr.mxu0 0.0
  %91 = vmatpush1.msra.mxu0 0.0
  %92 = vmatprep.subr.mxu0 0.0
  %93 = vmatpush1.msra.mxu0 0.0
  %94 = vmatprep.subr.mxu0 0.0
  %95 = vmatpush1.msra.mxu0 0.0
  %96 = vmatprep.subr.mxu0 0.0
  %97 = vmatpush1.msra.mxu0 0.0
  %98 = vmatprep.subr.mxu0 0.0
  %99 = vmatpush1.msra.mxu0 0.0
  %100 = vmatprep.subr.mxu0 0.0
  %101 = vmatpush1.msra.mxu0 0.0
  %102 = vmatprep.subr.mxu0 0.0
  %103 = vmatpush1.msra.mxu0 0.0
  %104 = vmatprep.subr.mxu0 0.0
  %105 = vmatpush1.msra.mxu0 0.0
  %106 = vmatprep.subr.mxu0 0.0
  %107 = vmatpush1.msra.mxu0 0.0
  %108 = vmatprep.mubr.f32.mxu0 0.0
  %109 = vmatmul.mubr.f32.gmra.mrb[0].mxu0 %v42
  %v110 = vpop.f32.mrb[0].mxu0
  %v111 = vadd.f32 0.0, %v110
  %v112 = vpop.f32.mrb[0].mxu0
  %v113 = vadd.f32 0.0, %v112
  %114 = vdwg.mxu0
  %v115 = vmul.f32 %v111, %v111
  %v116 = vmul.f32 %v113, %v113
  %v117 = vld [vmem:[%s2] sm:$0xff]
  %v118 = vld [vmem:[%s2 + $0x8] sm:$0xff]
  %v119 = vld [vmem:[%s2 + $0x10] sm:$0xff]
  %v120 = vld [vmem:[%s2 + $0x18] sm:$0xff]
  %v121 = vld [vmem:[%s2 + $0x20] sm:$0xff]
  %v122 = vld [vmem:[%s2 + $0x28] sm:$0xff]
  %v123 = vld [vmem:[%s2 + $0x30] sm:$0xff]
  %v124 = vld [vmem:[%s2 + $0x38] sm:$0xff]
  %v125 = vld [vmem:[%s2 + $0x40] sm:$0xff]
  %v126 = vld [vmem:[%s2 + $0x48] sm:$0xff]
  %v127 = vld [vmem:[%s2 + $0x50] sm:$0xff]
  %v128 = vld [vmem:[%s2 + $0x58] sm:$0xff]
  %v129 = vld [vmem:[%s2 + $0x60] sm:$0xff]
  %v130 = vld [vmem:[%s2 + $0x68] sm:$0xff]
  %v131 = vld [vmem:[%s2 + $0x70] sm:$0xff]
  %v132 = vld [vmem:[%s2 + $0x78] sm:$0xff]
  %v133 = vld [vmem:[%s2 + $0x80] sm:$0xff]
  %v134 = vld [vmem:[%s2 + $0x88] sm:$0xff]
  %v135 = vld [vmem:[%s2 + $0x90] sm:$0xff]
  %v136 = vld [vmem:[%s2 + $0x98] sm:$0xff]
  %v137 = vld [vmem:[%s2 + $0xa0] sm:$0xff]
  %v138 = vld [vmem:[%s2 + $0xa8] sm:$0xff]
  %v139 = vld [vmem:[%s2 + $0xb0] sm:$0xff]
  %v140 = vld [vmem:[%s2 + $0xb8] sm:$0xff]
  %v141 = vld [vmem:[%s2 + $0xc0] sm:$0xff]
  %v142 = vld [vmem:[%s2 + $0xc8] sm:$0xff]
  %v143 = vld [vmem:[%s2 + $0xd0] sm:$0xff]
  %v144 = vld [vmem:[%s2 + $0xd8] sm:$0xff]
  %v145 = vld [vmem:[%s2 + $0xe0] sm:$0xff]
  %v146 = vld [vmem:[%s2 + $0xe8] sm:$0xff]
  %v147 = vld [vmem:[%s2 + $0xf0] sm:$0xff]
  %v148 = vld [vmem:[%s2 + $0xf8] sm:$0xff]
  %149 = vmatprep.subr.mxu0 0.0
  %150 = vmatpush1.msra.mxu0 %v117
  %151 = vmatprep.subr.mxu0 0.0
  %152 = vmatpush1.msra.mxu0 %v118
  %153 = vmatprep.subr.mxu0 0.0
  %154 = vmatpush1.msra.mxu0 %v119
  %155 = vmatprep.subr.mxu0 0.0
  %156 = vmatpush1.msra.mxu0 %v120
  %157 = vmatprep.subr.mxu0 0.0
  %158 = vmatpush1.msra.mxu0 %v121
  %159 = vmatprep.subr.mxu0 0.0
  %160 = vmatpush1.msra.mxu0 %v122
  %161 = vmatprep.subr.mxu0 0.0
  %162 = vmatpush1.msra.mxu0 %v123
  %163 = vmatprep.subr.mxu0 0.0
  %164 = vmatpush1.msra.mxu0 %v124
  %165 = vmatprep.subr.mxu0 0.0
  %166 = vmatpush1.msra.mxu0 %v125
  %167 = vmatprep.subr.mxu0 0.0
  %168 = vmatpush1.msra.mxu0 %v126
  %169 = vmatprep.subr.mxu0 0.0
  %170 = vmatpush1.msra.mxu0 %v127
  %171 = vmatprep.subr.mxu0 0.0
  %172 = vmatpush1.msra.mxu0 %v128
  %173 = vmatprep.subr.mxu0 0.0
  %174 = vmatpush1.msra.mxu0 %v129
  %175 = vmatprep.subr.mxu0 0.0
  %176 = vmatpush1.msra.mxu0 %v130
  %177 = vmatprep.subr.mxu0 0.0
  %178 = vmatpush1.msra.mxu0 %v131
  %179 = vmatprep.subr.mxu0 0.0
  %180 = vmatpush1.msra.mxu0 %v132
  %181 = vmatprep.subr.mxu0 0.0
  %182 = vmatpush1.msra.mxu0 %v133
  %183 = vmatprep.subr.mxu0 0.0
  %184 = vmatpush1.msra.mxu0 %v134
  %185 = vmatprep.subr.mxu0 0.0
  %186 = vmatpush1.msra.mxu0 %v135
  %187 = vmatprep.subr.mxu0 0.0
  %188 = vmatpush1.msra.mxu0 %v136
  %189 = vmatprep.subr.mxu0 0.0
  %190 = vmatpush1.msra.mxu0 %v137
  %191 = vmatprep.subr.mxu0 0.0
  %192 = vmatpush1.msra.mxu0 %v138
  %193 = vmatprep.subr.mxu0 0.0
  %194 = vmatpush1.msra.mxu0 %v139
  %195 = vmatprep.subr.mxu0 0.0
  %196 = vmatpush1.msra.mxu0 %v140
  %197 = vmatprep.subr.mxu0 0.0
  %198 = vmatpush1.msra.mxu0 %v141
  %199 = vmatprep.subr.mxu0 0.0
  %200 = vmatpush1.msra.mxu0 %v142
  %201 = vmatprep.subr.mxu0 0.0
  %202 = vmatpush1.msra.mxu0 %v143
  %203 = vmatprep.subr.mxu0 0.0
  %204 = vmatpush1.msra.mxu0 %v144
  %205 = vmatprep.subr.mxu0 0.0
  %206 = vmatpush1.msra.mxu0 %v145
  %207 = vmatprep.subr.mxu0 0.0
  %208 = vmatpush1.msra.mxu0 %v146
  %209 = vmatprep.subr.mxu0 0.0
  %210 = vmatpush1.msra.mxu0 %v147
  %211 = vmatprep.subr.mxu0 0.0
  %212 = vmatpush1.msra.mxu0 %v148
  %213 = vmatprep.mubr.f32.mxu0 %v116
  %214 = vmatmul.mubr.f32.gmra.mrb[0].mxu0 %v115
  %v215 = vpop.f32.mrb[0].mxu0
  %v216 = vadd.f32 0.0, %v215
  %v217 = vpop.f32.mrb[0].mxu0
  %218 = vdwg.mxu0
  %219 = vst [vmem:[%s9] sm:$0xff] %v216
  %v220 = vpack.c.bf16 %v216, %v216
  %v221 = vld [vmem:[%s3] sm:$0xff]
  %v222 = vld [vmem:[%s3 + $0x8] sm:$0xff]
  %v223 = vld [vmem:[%s3 + $0x10] sm:$0xff]
  %v224 = vld [vmem:[%s3 + $0x18] sm:$0xff]
  %v225 = vld [vmem:[%s3 + $0x20] sm:$0xff]
  %v226 = vld [vmem:[%s3 + $0x28] sm:$0xff]
  %v227 = vld [vmem:[%s3 + $0x30] sm:$0xff]
  %v228 = vld [vmem:[%s3 + $0x38] sm:$0xff]
  %v229 = vld [vmem:[%s3 + $0x40] sm:$0xff]
  %v230 = vld [vmem:[%s3 + $0x48] sm:$0xff]
  %v231 = vld [vmem:[%s3 + $0x50] sm:$0xff]
  %v232 = vld [vmem:[%s3 + $0x58] sm:$0xff]
  %v233 = vld [vmem:[%s3 + $0x60] sm:$0xff]
  %v234 = vld [vmem:[%s3 + $0x68] sm:$0xff]
  %v235 = vld [vmem:[%s3 + $0x70] sm:$0xff]
  %v236 = vld [vmem:[%s3 + $0x78] sm:$0xff]
  %v237 = vld [vmem:[%s3 + $0x80] sm:$0xff]
  %v238 = vld [vmem:[%s3 + $0x88] sm:$0xff]
  %v239 = vld [vmem:[%s3 + $0x90] sm:$0xff]
  %v240 = vld [vmem:[%s3 + $0x98] sm:$0xff]
  %v241 = vld [vmem:[%s3 + $0xa0] sm:$0xff]
  %v242 = vld [vmem:[%s3 + $0xa8] sm:$0xff]
  %v243 = vld [vmem:[%s3 + $0xb0] sm:$0xff]
  %v244 = vld [vmem:[%s3 + $0xb8] sm:$0xff]
  %v245 = vld [vmem:[%s3 + $0xc0] sm:$0xff]
  %v246 = vld [vmem:[%s3 + $0xc8] sm:$0xff]
  %v247 = vld [vmem:[%s3 + $0xd0] sm:$0xff]
  %v248 = vld [vmem:[%s3 + $0xd8] sm:$0xff]
  %v249 = vld [vmem:[%s3 + $0xe0] sm:$0xff]
  %v250 = vld [vmem:[%s3 + $0xe8] sm:$0xff]
  %v251 = vld [vmem:[%s3 + $0xf0] sm:$0xff]
  %v252 = vld [vmem:[%s3 + $0xf8] sm:$0xff]
  %v253 = vld [vmem:[%s3 + $0x100] sm:$0xff]
  %v254 = vld [vmem:[%s3 + $0x108] sm:$0xff]
  %v255 = vld [vmem:[%s3 + $0x110] sm:$0xff]
  %v256 = vld [vmem:[%s3 + $0x118] sm:$0xff]
  %v257 = vld [vmem:[%s3 + $0x120] sm:$0xff]
  %v258 = vld [vmem:[%s3 + $0x128] sm:$0xff]
  %v259 = vld [vmem:[%s3 + $0x130] sm:$0xff]
  %v260 = vld [vmem:[%s3 + $0x138] sm:$0xff]
  %v261 = vld [vmem:[%s3 + $0x140] sm:$0xff]
  %v262 = vld [vmem:[%s3 + $0x148] sm:$0xff]
  %v263 = vld [vmem:[%s3 + $0x150] sm:$0xff]
  %v264 = vld [vmem:[%s3 + $0x158] sm:$0xff]
  %v265 = vld [vmem:[%s3 + $0x160] sm:$0xff]
  %v266 = vld [vmem:[%s3 + $0x168] sm:$0xff]
  %v267 = vld [vmem:[%s3 + $0x170] sm:$0xff]
  %v268 = vld [vmem:[%s3 + $0x178] sm:$0xff]
  %v269 = vld [vmem:[%s3 + $0x180] sm:$0xff]
  %v270 = vld [vmem:[%s3 + $0x188] sm:$0xff]
  %v271 = vld [vmem:[%s3 + $0x190] sm:$0xff]
  %v272 = vld [vmem:[%s3 + $0x198] sm:$0xff]
  %v273 = vld [vmem:[%s3 + $0x1a0] sm:$0xff]
  %v274 = vld [vmem:[%s3 + $0x1a8] sm:$0xff]
  %v275 = vld [vmem:[%s3 + $0x1b0] sm:$0xff]
  %v276 = vld [vmem:[%s3 + $0x1b8] sm:$0xff]
  %v277 = vld [vmem:[%s3 + $0x1c0] sm:$0xff]
  %v278 = vld [vmem:[%s3 + $0x1c8] sm:$0xff]
  %v279 = vld [vmem:[%s3 + $0x1d0] sm:$0xff]
  %v280 = vld [vmem:[%s3 + $0x1d8] sm:$0xff]
  %v281 = vld [vmem:[%s3 + $0x1e0] sm:$0xff]
  %v282 = vld [vmem:[%s3 + $0x1e8] sm:$0xff]
  %v283 = vld [vmem:[%s3 + $0x1f0] sm:$0xff]
  %v284 = vld [vmem:[%s3 + $0x1f8] sm:$0xff]
  %v285 = vld [vmem:[%s3 + $0x200] sm:$0xff]
  %v286 = vld [vmem:[%s3 + $0x208] sm:$0xff]
  %v287 = vld [vmem:[%s3 + $0x210] sm:$0xff]
  %v288 = vld [vmem:[%s3 + $0x218] sm:$0xff]
  %v289 = vld [vmem:[%s3 + $0x220] sm:$0xff]
  %v290 = vld [vmem:[%s3 + $0x228] sm:$0xff]
  %v291 = vld [vmem:[%s3 + $0x230] sm:$0xff]
  %v292 = vld [vmem:[%s3 + $0x238] sm:$0xff]
  %v293 = vld [vmem:[%s3 + $0x240] sm:$0xff]
  %v294 = vld [vmem:[%s3 + $0x248] sm:$0xff]
  %v295 = vld [vmem:[%s3 + $0x250] sm:$0xff]
  %v296 = vld [vmem:[%s3 + $0x258] sm:$0xff]
  %v297 = vld [vmem:[%s3 + $0x260] sm:$0xff]
  %v298 = vld [vmem:[%s3 + $0x268] sm:$0xff]
  %v299 = vld [vmem:[%s3 + $0x270] sm:$0xff]
  %v300 = vld [vmem:[%s3 + $0x278] sm:$0xff]
  %v301 = vld [vmem:[%s3 + $0x280] sm:$0xff]
  %v302 = vld [vmem:[%s3 + $0x288] sm:$0xff]
  %v303 = vld [vmem:[%s3 + $0x290] sm:$0xff]
  %v304 = vld [vmem:[%s3 + $0x298] sm:$0xff]
  %v305 = vld [vmem:[%s3 + $0x2a0] sm:$0xff]
  %v306 = vld [vmem:[%s3 + $0x2a8] sm:$0xff]
  %v307 = vld [vmem:[%s3 + $0x2b0] sm:$0xff]
  %v308 = vld [vmem:[%s3 + $0x2b8] sm:$0xff]
  %v309 = vld [vmem:[%s3 + $0x2c0] sm:$0xff]
  %v310 = vld [vmem:[%s3 + $0x2c8] sm:$0xff]
  %v311 = vld [vmem:[%s3 + $0x2d0] sm:$0xff]
  %v312 = vld [vmem:[%s3 + $0x2d8] sm:$0xff]
  %v313 = vld [vmem:[%s3 + $0x2e0] sm:$0xff]
  %v314 = vld [vmem:[%s3 + $0x2e8] sm:$0xff]
  %v315 = vld [vmem:[%s3 + $0x2f0] sm:$0xff]
  %v316 = vld [vmem:[%s3 + $0x2f8] sm:$0xff]
  %v317 = vld [vmem:[%s3 + $0x300] sm:$0xff]
  %v318 = vld [vmem:[%s3 + $0x308] sm:$0xff]
  %v319 = vld [vmem:[%s3 + $0x310] sm:$0xff]
  %v320 = vld [vmem:[%s3 + $0x318] sm:$0xff]
  %v321 = vld [vmem:[%s3 + $0x320] sm:$0xff]
  %v322 = vld [vmem:[%s3 + $0x328] sm:$0xff]
  %v323 = vld [vmem:[%s3 + $0x330] sm:$0xff]
  %v324 = vld [vmem:[%s3 + $0x338] sm:$0xff]
  %v325 = vld [vmem:[%s3 + $0x340] sm:$0xff]
  %v326 = vld [vmem:[%s3 + $0x348] sm:$0xff]
  %v327 = vld [vmem:[%s3 + $0x350] sm:$0xff]
  %v328 = vld [vmem:[%s3 + $0x358] sm:$0xff]
  %v329 = vld [vmem:[%s3 + $0x360] sm:$0xff]
  %v330 = vld [vmem:[%s3 + $0x368] sm:$0xff]
  %v331 = vld [vmem:[%s3 + $0x370] sm:$0xff]
  %v332 = vld [vmem:[%s3 + $0x378] sm:$0xff]
  %v333 = vld [vmem:[%s3 + $0x380] sm:$0xff]
  %v334 = vld [vmem:[%s3 + $0x388] sm:$0xff]
  %v335 = vld [vmem:[%s3 + $0x390] sm:$0xff]
  %v336 = vld [vmem:[%s3 + $0x398] sm:$0xff]
  %v337 = vld [vmem:[%s3 + $0x3a0] sm:$0xff]
  %v338 = vld [vmem:[%s3 + $0x3a8] sm:$0xff]
  %v339 = vld [vmem:[%s3 + $0x3b0] sm:$0xff]
  %v340 = vld [vmem:[%s3 + $0x3b8] sm:$0xff]
  %v341 = vld [vmem:[%s3 + $0x3c0] sm:$0xff]
  %v342 = vld [vmem:[%s3 + $0x3c8] sm:$0xff]
  %v343 = vld [vmem:[%s3 + $0x3d0] sm:$0xff]
  %v344 = vld [vmem:[%s3 + $0x3d8] sm:$0xff]
  %v345 = vld [vmem:[%s3 + $0x3e0] sm:$0xff]
  %v346 = vld [vmem:[%s3 + $0x3e8] sm:$0xff]
  %v347 = vld [vmem:[%s3 + $0x3f0] sm:$0xff]
  %v348 = vld [vmem:[%s3 + $0x3f8] sm:$0xff]
  %v349 = vld [vmem:[%s3 + $0x400] sm:$0xff]
  %v350 = vld [vmem:[%s3 + $0x408] sm:$0xff]
  %v351 = vld [vmem:[%s3 + $0x410] sm:$0xff]
  %v352 = vld [vmem:[%s3 + $0x418] sm:$0xff]
  %v353 = vld [vmem:[%s3 + $0x420] sm:$0xff]
  %v354 = vld [vmem:[%s3 + $0x428] sm:$0xff]
  %v355 = vld [vmem:[%s3 + $0x430] sm:$0xff]
  %v356 = vld [vmem:[%s3 + $0x438] sm:$0xff]
  %v357 = vld [vmem:[%s3 + $0x440] sm:$0xff]
  %v358 = vld [vmem:[%s3 + $0x448] sm:$0xff]
  %v359 = vld [vmem:[%s3 + $0x450] sm:$0xff]
  %v360 = vld [vmem:[%s3 + $0x458] sm:$0xff]
  %v361 = vld [vmem:[%s3 + $0x460] sm:$0xff]
  %v362 = vld [vmem:[%s3 + $0x468] sm:$0xff]
  %v363 = vld [vmem:[%s3 + $0x470] sm:$0xff]
  %v364 = vld [vmem:[%s3 + $0x478] sm:$0xff]
  %v365 = vld [vmem:[%s4] sm:$0xff]
  %v366 = vld [vmem:[%s4 + $0x8] sm:$0xff]
  %v367 = vld [vmem:[%s4 + $0x10] sm:$0x3]
  %v371 = vlaneseq
  %v372 = vshrl.u32 %v371, 7
  %v373 = vsub.s32 0, %v372
  %v374 = vrot.slane %v365, %v373
  %v375 = vlaneseq
  %v376 = vshrl.u32 %v375, 7
  %v377 = vsub.s32 1, %v376
  %v378 = vrot.slane %v365, %v377
  %v379 = vlaneseq
  %v380 = vshrl.u32 %v379, 7
  %v381 = vsub.s32 2, %v380
  %v382 = vrot.slane %v365, %v381
  %v383 = vlaneseq
  %v384 = vshrl.u32 %v383, 7
  %v385 = vsub.s32 3, %v384
  %v386 = vrot.slane %v365, %v385
  %v387 = vlaneseq
  %v388 = vshrl.u32 %v387, 7
  %v389 = vsub.s32 4, %v388
  %v390 = vrot.slane %v365, %v389
  %v391 = vlaneseq
  %v392 = vshrl.u32 %v391, 7
  %v393 = vsub.s32 5, %v392
  %v394 = vrot.slane %v365, %v393
  %v395 = vlaneseq
  %v396 = vshrl.u32 %v395, 7
  %v397 = vsub.s32 6, %v396
  %v398 = vrot.slane %v365, %v397
  %v399 = vlaneseq
  %v400 = vshrl.u32 %v399, 7
  %v401 = vsub.s32 7, %v400
  %v402 = vrot.slane %v365, %v401
  %v403 = vlaneseq
  %v404 = vshrl.u32 %v403, 7
  %v405 = vsub.s32 0, %v404
  %v406 = vrot.slane %v366, %v405
  %v407 = vlaneseq
  %v408 = vshrl.u32 %v407, 7
  %v409 = vsub.s32 1, %v408
  %v410 = vrot.slane %v366, %v409
  %v411 = vlaneseq
  %v412 = vshrl.u32 %v411, 7
  %v413 = vsub.s32 2, %v412
  %v414 = vrot.slane %v366, %v413
  %v415 = vlaneseq
  %v416 = vshrl.u32 %v415, 7
  %v417 = vsub.s32 3, %v416
  %v418 = vrot.slane %v366, %v417
  %v419 = vlaneseq
  %v420 = vshrl.u32 %v419, 7
  %v421 = vsub.s32 4, %v420
  %v422 = vrot.slane %v366, %v421
  %v423 = vlaneseq
  %v424 = vshrl.u32 %v423, 7
  %v425 = vsub.s32 5, %v424
  %v426 = vrot.slane %v366, %v425
  %v427 = vlaneseq
  %v428 = vshrl.u32 %v427, 7
  %v429 = vsub.s32 6, %v428
  %v430 = vrot.slane %v366, %v429
  %v431 = vlaneseq
  %v432 = vshrl.u32 %v431, 7
  %v433 = vsub.s32 7, %v432
  %v434 = vrot.slane %v366, %v433
  %v435 = vlaneseq
  %v436 = vshrl.u32 %v435, 7
  %v437 = vsub.s32 0, %v436
  %v438 = vrot.slane %v367, %v437
  %v439 = vlaneseq
  %v440 = vshrl.u32 %v439, 7
  %v441 = vsub.s32 1, %v440
  %v442 = vrot.slane %v367, %v441
  %v605 = vunpack.c.l.b16 %v221
  %v606 = vunpack.c.h.b16 %v221
  %v607 = vunpack.c.l.b16 %v222
  %v608 = vunpack.c.h.b16 %v222
  %v609 = vunpack.c.l.b16 %v223
  %v610 = vunpack.c.h.b16 %v223
  %v611 = vunpack.c.l.b16 %v224
  %v612 = vunpack.c.h.b16 %v224
  %v613 = vunpack.c.l.b16 %v225
  %v614 = vunpack.c.h.b16 %v225
  %v615 = vunpack.c.l.b16 %v226
  %v616 = vunpack.c.h.b16 %v226
  %v617 = vunpack.c.l.b16 %v227
  %v618 = vunpack.c.h.b16 %v227
  %v619 = vunpack.c.l.b16 %v228
  %v620 = vunpack.c.h.b16 %v228
  %v621 = vunpack.c.l.b16 %v229
  %v622 = vunpack.c.h.b16 %v229
  %v623 = vunpack.c.l.b16 %v230
  %v624 = vunpack.c.h.b16 %v230
  %v625 = vunpack.c.l.b16 %v231
  %v626 = vunpack.c.h.b16 %v231
  %v627 = vunpack.c.l.b16 %v232
  %v628 = vunpack.c.h.b16 %v232
  %v629 = vunpack.c.l.b16 %v233
  %v630 = vunpack.c.h.b16 %v233
  %v631 = vunpack.c.l.b16 %v234
  %v632 = vunpack.c.h.b16 %v234
  %v633 = vunpack.c.l.b16 %v235
  %v634 = vunpack.c.h.b16 %v235
  %v635 = vunpack.c.l.b16 %v236
  %v636 = vunpack.c.h.b16 %v236
  %v637 = vunpack.c.l.b16 %v237
  %v638 = vunpack.c.h.b16 %v237
  %v639 = vunpack.c.l.b16 %v238
  %v640 = vunpack.c.h.b16 %v238
  %v641 = vunpack.c.l.b16 %v239
  %v642 = vunpack.c.h.b16 %v239
  %v643 = vunpack.c.l.b16 %v240
  %v644 = vunpack.c.h.b16 %v240
  %v645 = vunpack.c.l.b16 %v241
  %v646 = vunpack.c.h.b16 %v241
  %v647 = vunpack.c.l.b16 %v242
  %v648 = vunpack.c.h.b16 %v242
  %v649 = vunpack.c.l.b16 %v243
  %v650 = vunpack.c.h.b16 %v243
  %v651 = vunpack.c.l.b16 %v244
  %v652 = vunpack.c.h.b16 %v244
  %v653 = vunpack.c.l.b16 %v245
  %v654 = vunpack.c.h.b16 %v245
  %v655 = vunpack.c.l.b16 %v246
  %v656 = vunpack.c.h.b16 %v246
  %v657 = vunpack.c.l.b16 %v247
  %v658 = vunpack.c.h.b16 %v247
  %v659 = vunpack.c.l.b16 %v248
  %v660 = vunpack.c.h.b16 %v248
  %v661 = vunpack.c.l.b16 %v249
  %v662 = vunpack.c.h.b16 %v249
  %v663 = vunpack.c.l.b16 %v250
  %v664 = vunpack.c.h.b16 %v250
  %v665 = vunpack.c.l.b16 %v251
  %v666 = vunpack.c.h.b16 %v251
  %v667 = vunpack.c.l.b16 %v252
  %v668 = vunpack.c.h.b16 %v252
  %v669 = vunpack.c.l.b16 %v253
  %v670 = vunpack.c.h.b16 %v253
  %v671 = vunpack.c.l.b16 %v254
  %v672 = vunpack.c.h.b16 %v254
  %v673 = vunpack.c.l.b16 %v255
  %v674 = vunpack.c.h.b16 %v255
  %v675 = vunpack.c.l.b16 %v256
  %v676 = vunpack.c.h.b16 %v256
  %v677 = vunpack.c.l.b16 %v257
  %v678 = vunpack.c.h.b16 %v257
  %v679 = vunpack.c.l.b16 %v258
  %v680 = vunpack.c.h.b16 %v258
  %v681 = vunpack.c.l.b16 %v259
  %v682 = vunpack.c.h.b16 %v259
  %v683 = vunpack.c.l.b16 %v260
  %v684 = vunpack.c.h.b16 %v260
  %v685 = vunpack.c.l.b16 %v261
  %v686 = vunpack.c.h.b16 %v261
  %v687 = vunpack.c.l.b16 %v262
  %v688 = vunpack.c.h.b16 %v262
  %v689 = vunpack.c.l.b16 %v263
  %v690 = vunpack.c.h.b16 %v263
  %v691 = vunpack.c.l.b16 %v264
  %v692 = vunpack.c.h.b16 %v264
  %v693 = vunpack.c.l.b16 %v265
  %v694 = vunpack.c.h.b16 %v265
  %v695 = vunpack.c.l.b16 %v266
  %v696 = vunpack.c.h.b16 %v266
  %v697 = vunpack.c.l.b16 %v267
  %v698 = vunpack.c.h.b16 %v267
  %v699 = vunpack.c.l.b16 %v268
  %v700 = vunpack.c.h.b16 %v268
  %v701 = vunpack.c.l.b16 %v269
  %v702 = vunpack.c.h.b16 %v269
  %v703 = vunpack.c.l.b16 %v270
  %v704 = vunpack.c.h.b16 %v270
  %v705 = vunpack.c.l.b16 %v271
  %v706 = vunpack.c.h.b16 %v271
  %v707 = vunpack.c.l.b16 %v272
  %v708 = vunpack.c.h.b16 %v272
  %v709 = vunpack.c.l.b16 %v273
  %v710 = vunpack.c.h.b16 %v273
  %v711 = vunpack.c.l.b16 %v274
  %v712 = vunpack.c.h.b16 %v274
  %v713 = vunpack.c.l.b16 %v275
  %v714 = vunpack.c.h.b16 %v275
  %v715 = vunpack.c.l.b16 %v276
  %v716 = vunpack.c.h.b16 %v276
  %v717 = vunpack.c.l.b16 %v277
  %v718 = vunpack.c.h.b16 %v277
  %v719 = vunpack.c.l.b16 %v278
  %v720 = vunpack.c.h.b16 %v278
  %v721 = vunpack.c.l.b16 %v279
  %v722 = vunpack.c.h.b16 %v279
  %v723 = vunpack.c.l.b16 %v280
  %v724 = vunpack.c.h.b16 %v280
  %v725 = vunpack.c.l.b16 %v281
  %v726 = vunpack.c.h.b16 %v281
  %v727 = vunpack.c.l.b16 %v282
  %v728 = vunpack.c.h.b16 %v282
  %v729 = vunpack.c.l.b16 %v283
  %v730 = vunpack.c.h.b16 %v283
  %v731 = vunpack.c.l.b16 %v284
  %v732 = vunpack.c.h.b16 %v284
  %v733 = vunpack.c.l.b16 %v285
  %v734 = vunpack.c.h.b16 %v285
  %v735 = vunpack.c.l.b16 %v286
  %v736 = vunpack.c.h.b16 %v286
  %v737 = vunpack.c.l.b16 %v287
  %v738 = vunpack.c.h.b16 %v287
  %v739 = vunpack.c.l.b16 %v288
  %v740 = vunpack.c.h.b16 %v288
  %v741 = vunpack.c.l.b16 %v289
  %v742 = vunpack.c.h.b16 %v289
  %v743 = vunpack.c.l.b16 %v290
  %v744 = vunpack.c.h.b16 %v290
  %v745 = vunpack.c.l.b16 %v291
  %v746 = vunpack.c.h.b16 %v291
  %v747 = vunpack.c.l.b16 %v292
  %v748 = vunpack.c.h.b16 %v292
  %v749 = vunpack.c.l.b16 %v293
  %v750 = vunpack.c.h.b16 %v293
  %v751 = vunpack.c.l.b16 %v294
  %v752 = vunpack.c.h.b16 %v294
  %v753 = vunpack.c.l.b16 %v295
  %v754 = vunpack.c.h.b16 %v295
  %v755 = vunpack.c.l.b16 %v296
  %v756 = vunpack.c.h.b16 %v296
  %v757 = vunpack.c.l.b16 %v297
  %v758 = vunpack.c.h.b16 %v297
  %v759 = vunpack.c.l.b16 %v298
  %v760 = vunpack.c.h.b16 %v298
  %v761 = vunpack.c.l.b16 %v299
  %v762 = vunpack.c.h.b16 %v299
  %v763 = vunpack.c.l.b16 %v300
  %v764 = vunpack.c.h.b16 %v300
  %v765 = vunpack.c.l.b16 %v301
  %v766 = vunpack.c.h.b16 %v301
  %v767 = vunpack.c.l.b16 %v302
  %v768 = vunpack.c.h.b16 %v302
  %v769 = vunpack.c.l.b16 %v303
  %v770 = vunpack.c.h.b16 %v303
  %v771 = vunpack.c.l.b16 %v304
  %v772 = vunpack.c.h.b16 %v304
  %v773 = vunpack.c.l.b16 %v305
  %v774 = vunpack.c.h.b16 %v305
  %v775 = vunpack.c.l.b16 %v306
  %v776 = vunpack.c.h.b16 %v306
  %v777 = vunpack.c.l.b16 %v307
  %v778 = vunpack.c.h.b16 %v307
  %v779 = vunpack.c.l.b16 %v308
  %v780 = vunpack.c.h.b16 %v308
  %v781 = vunpack.c.l.b16 %v309
  %v782 = vunpack.c.h.b16 %v309
  %v783 = vunpack.c.l.b16 %v310
  %v784 = vunpack.c.h.b16 %v310
  %v785 = vunpack.c.l.b16 %v311
  %v786 = vunpack.c.h.b16 %v311
  %v787 = vunpack.c.l.b16 %v312
  %v788 = vunpack.c.h.b16 %v312
  %v789 = vunpack.c.l.b16 %v313
  %v790 = vunpack.c.h.b16 %v313
  %v791 = vunpack.c.l.b16 %v314
  %v792 = vunpack.c.h.b16 %v314
  %v793 = vunpack.c.l.b16 %v315
  %v794 = vunpack.c.h.b16 %v315
  %v795 = vunpack.c.l.b16 %v316
  %v796 = vunpack.c.h.b16 %v316
  %v797 = vunpack.c.l.b16 %v317
  %v798 = vunpack.c.h.b16 %v317
  %v799 = vunpack.c.l.b16 %v318
  %v800 = vunpack.c.h.b16 %v318
  %v801 = vunpack.c.l.b16 %v319
  %v802 = vunpack.c.h.b16 %v319
  %v803 = vunpack.c.l.b16 %v320
  %v804 = vunpack.c.h.b16 %v320
  %v805 = vunpack.c.l.b16 %v321
  %v806 = vunpack.c.h.b16 %v321
  %v807 = vunpack.c.l.b16 %v322
  %v808 = vunpack.c.h.b16 %v322
  %v809 = vunpack.c.l.b16 %v323
  %v810 = vunpack.c.h.b16 %v323
  %v811 = vunpack.c.l.b16 %v324
  %v812 = vunpack.c.h.b16 %v324
  %v813 = vunpack.c.l.b16 %v325
  %v814 = vunpack.c.h.b16 %v325
  %v815 = vunpack.c.l.b16 %v326
  %v816 = vunpack.c.h.b16 %v326
  %v817 = vunpack.c.l.b16 %v327
  %v818 = vunpack.c.h.b16 %v327
  %v819 = vunpack.c.l.b16 %v328
  %v820 = vunpack.c.h.b16 %v328
  %v821 = vunpack.c.l.b16 %v329
  %v822 = vunpack.c.h.b16 %v329
  %v823 = vunpack.c.l.b16 %v330
  %v824 = vunpack.c.h.b16 %v330
  %v825 = vunpack.c.l.b16 %v331
  %v826 = vunpack.c.h.b16 %v331
  %v827 = vunpack.c.l.b16 %v332
  %v828 = vunpack.c.h.b16 %v332
  %v829 = vunpack.c.l.b16 %v333
  %v830 = vunpack.c.h.b16 %v333
  %v831 = vunpack.c.l.b16 %v334
  %v832 = vunpack.c.h.b16 %v334
  %v833 = vunpack.c.l.b16 %v335
  %v834 = vunpack.c.h.b16 %v335
  %v835 = vunpack.c.l.b16 %v336
  %v836 = vunpack.c.h.b16 %v336
  %v837 = vunpack.c.l.b16 %v337
  %v838 = vunpack.c.h.b16 %v337
  %v839 = vunpack.c.l.b16 %v338
  %v840 = vunpack.c.h.b16 %v338
  %v841 = vunpack.c.l.b16 %v339
  %v842 = vunpack.c.h.b16 %v339
  %v843 = vunpack.c.l.b16 %v340
  %v844 = vunpack.c.h.b16 %v340
  %v845 = vunpack.c.l.b16 %v341
  %v846 = vunpack.c.h.b16 %v341
  %v847 = vunpack.c.l.b16 %v342
  %v848 = vunpack.c.h.b16 %v342
  %v849 = vunpack.c.l.b16 %v343
  %v850 = vunpack.c.h.b16 %v343
  %v851 = vunpack.c.l.b16 %v344
  %v852 = vunpack.c.h.b16 %v344
  %v853 = vunpack.c.l.b16 %v345
  %v854 = vunpack.c.h.b16 %v345
  %v855 = vunpack.c.l.b16 %v346
  %v856 = vunpack.c.h.b16 %v346
  %v857 = vunpack.c.l.b16 %v347
  %v858 = vunpack.c.h.b16 %v347
  %v859 = vunpack.c.l.b16 %v348
  %v860 = vunpack.c.h.b16 %v348
  %v861 = vunpack.c.l.b16 %v349
  %v862 = vunpack.c.h.b16 %v349
  %v863 = vunpack.c.l.b16 %v350
  %v864 = vunpack.c.h.b16 %v350
  %v865 = vunpack.c.l.b16 %v351
  %v866 = vunpack.c.h.b16 %v351
  %v867 = vunpack.c.l.b16 %v352
  %v868 = vunpack.c.h.b16 %v352
  %v869 = vunpack.c.l.b16 %v353
  %v870 = vunpack.c.h.b16 %v353
  %v871 = vunpack.c.l.b16 %v354
  %v872 = vunpack.c.h.b16 %v354
  %v873 = vunpack.c.l.b16 %v355
  %v874 = vunpack.c.h.b16 %v355
  %v875 = vunpack.c.l.b16 %v356
  %v876 = vunpack.c.h.b16 %v356
  %v877 = vunpack.c.l.b16 %v357
  %v878 = vunpack.c.h.b16 %v357
  %v879 = vunpack.c.l.b16 %v358
  %v880 = vunpack.c.h.b16 %v358
  %v881 = vunpack.c.l.b16 %v359
  %v882 = vunpack.c.h.b16 %v359
  %v883 = vunpack.c.l.b16 %v360
  %v884 = vunpack.c.h.b16 %v360
  %v885 = vunpack.c.l.b16 %v361
  %v886 = vunpack.c.h.b16 %v361
  %v887 = vunpack.c.l.b16 %v362
  %v888 = vunpack.c.h.b16 %v362
  %v889 = vunpack.c.l.b16 %v363
  %v890 = vunpack.c.h.b16 %v363
  %v891 = vunpack.c.l.b16 %v364
  %v892 = vunpack.c.h.b16 %v364
  %v893 = vpack.c.b16 %v623, %v605
  %v894 = vpack.c.b16 %v624, %v606
  %v895 = vpack.c.b16 %v625, %v607
  %v896 = vpack.c.b16 %v626, %v608
  %v897 = vpack.c.b16 %v627, %v609
  %v898 = vpack.c.b16 %v628, %v610
  %v899 = vpack.c.b16 %v629, %v611
  %v900 = vpack.c.b16 %v630, %v612
  %v901 = vpack.c.b16 %v631, %v613
  %v902 = vpack.c.b16 %v632, %v614
  %v903 = vpack.c.b16 %v633, %v615
  %v904 = vpack.c.b16 %v634, %v616
  %v905 = vpack.c.b16 %v635, %v617
  %v906 = vpack.c.b16 %v636, %v618
  %v907 = vpack.c.b16 %v637, %v619
  %v908 = vpack.c.b16 %v638, %v620
  %v909 = vpack.c.b16 %v639, %v621
  %v910 = vpack.c.b16 %v640, %v622
  %v911 = vpack.c.b16 %v659, %v641
  %v912 = vpack.c.b16 %v660, %v642
  %v913 = vpack.c.b16 %v661, %v643
  %v914 = vpack.c.b16 %v662, %v644
  %v915 = vpack.c.b16 %v663, %v645
  %v916 = vpack.c.b16 %v664, %v646
  %v917 = vpack.c.b16 %v665, %v647
  %v918 = vpack.c.b16 %v666, %v648
  %v919 = vpack.c.b16 %v667, %v649
  %v920 = vpack.c.b16 %v668, %v650
  %v921 = vpack.c.b16 %v669, %v651
  %v922 = vpack.c.b16 %v670, %v652
  %v923 = vpack.c.b16 %v671, %v653
  %v924 = vpack.c.b16 %v672, %v654
  %v925 = vpack.c.b16 %v673, %v655
  %v926 = vpack.c.b16 %v674, %v656
  %v927 = vpack.c.b16 %v675, %v657
  %v928 = vpack.c.b16 %v676, %v658
  %v929 = vpack.c.b16 %v695, %v677
  %v930 = vpack.c.b16 %v696, %v678
  %v931 = vpack.c.b16 %v697, %v679
  %v932 = vpack.c.b16 %v698, %v680
  %v933 = vpack.c.b16 %v699, %v681
  %v934 = vpack.c.b16 %v700, %v682
  %v935 = vpack.c.b16 %v701, %v683
  %v936 = vpack.c.b16 %v702, %v684
  %v937 = vpack.c.b16 %v703, %v685
  %v938 = vpack.c.b16 %v704, %v686
  %v939 = vpack.c.b16 %v705, %v687
  %v940 = vpack.c.b16 %v706, %v688
  %v941 = vpack.c.b16 %v707, %v689
  %v942 = vpack.c.b16 %v708, %v690
  %v943 = vpack.c.b16 %v709, %v691
  %v944 = vpack.c.b16 %v710, %v692
  %v945 = vpack.c.b16 %v711, %v693
  %v946 = vpack.c.b16 %v712, %v694
  %v947 = vpack.c.b16 %v731, %v713
  %v948 = vpack.c.b16 %v732, %v714
  %v949 = vpack.c.b16 %v733, %v715
  %v950 = vpack.c.b16 %v734, %v716
  %v951 = vpack.c.b16 %v735, %v717
  %v952 = vpack.c.b16 %v736, %v718
  %v953 = vpack.c.b16 %v737, %v719
  %v954 = vpack.c.b16 %v738, %v720
  %v955 = vpack.c.b16 %v739, %v721
  %v956 = vpack.c.b16 %v740, %v722
  %v957 = vpack.c.b16 %v741, %v723
  %v958 = vpack.c.b16 %v742, %v724
  %v959 = vpack.c.b16 %v743, %v725
  %v960 = vpack.c.b16 %v744, %v726
  %v961 = vpack.c.b16 %v745, %v727
  %v962 = vpack.c.b16 %v746, %v728
  %v963 = vpack.c.b16 %v747, %v729
  %v964 = vpack.c.b16 %v748, %v730
  %v965 = vpack.c.b16 %v767, %v749
  %v966 = vpack.c.b16 %v768, %v750
  %v967 = vpack.c.b16 %v769, %v751
  %v968 = vpack.c.b16 %v770, %v752
  %v969 = vpack.c.b16 %v771, %v753
  %v970 = vpack.c.b16 %v772, %v754
  %v971 = vpack.c.b16 %v773, %v755
  %v972 = vpack.c.b16 %v774, %v756
  %v973 = vpack.c.b16 %v775, %v757
  %v974 = vpack.c.b16 %v776, %v758
  %v975 = vpack.c.b16 %v777, %v759
  %v976 = vpack.c.b16 %v778, %v760
  %v977 = vpack.c.b16 %v779, %v761
  %v978 = vpack.c.b16 %v780, %v762
  %v979 = vpack.c.b16 %v781, %v763
  %v980 = vpack.c.b16 %v782, %v764
  %v981 = vpack.c.b16 %v783, %v765
  %v982 = vpack.c.b16 %v784, %v766
  %v983 = vpack.c.b16 %v803, %v785
  %v984 = vpack.c.b16 %v804, %v786
  %v985 = vpack.c.b16 %v805, %v787
  %v986 = vpack.c.b16 %v806, %v788
  %v987 = vpack.c.b16 %v807, %v789
  %v988 = vpack.c.b16 %v808, %v790
  %v989 = vpack.c.b16 %v809, %v791
  %v990 = vpack.c.b16 %v810, %v792
  %v991 = vpack.c.b16 %v811, %v793
  %v992 = vpack.c.b16 %v812, %v794
  %v993 = vpack.c.b16 %v813, %v795
  %v994 = vpack.c.b16 %v814, %v796
  %v995 = vpack.c.b16 %v815, %v797
  %v996 = vpack.c.b16 %v816, %v798
  %v997 = vpack.c.b16 %v817, %v799
  %v998 = vpack.c.b16 %v818, %v800
  %v999 = vpack.c.b16 %v819, %v801
  %v1000 = vpack.c.b16 %v820, %v802
  %v1001 = vpack.c.b16 %v839, %v821
  %v1002 = vpack.c.b16 %v840, %v822
  %v1003 = vpack.c.b16 %v841, %v823
  %v1004 = vpack.c.b16 %v842, %v824
  %v1005 = vpack.c.b16 %v843, %v825
  %v1006 = vpack.c.b16 %v844, %v826
  %v1007 = vpack.c.b16 %v845, %v827
  %v1008 = vpack.c.b16 %v846, %v828
  %v1009 = vpack.c.b16 %v847, %v829
  %v1010 = vpack.c.b16 %v848, %v830
  %v1011 = vpack.c.b16 %v849, %v831
  %v1012 = vpack.c.b16 %v850, %v832
  %v1013 = vpack.c.b16 %v851, %v833
  %v1014 = vpack.c.b16 %v852, %v834
  %v1015 = vpack.c.b16 %v853, %v835
  %v1016 = vpack.c.b16 %v854, %v836
  %v1017 = vpack.c.b16 %v855, %v837
  %v1018 = vpack.c.b16 %v856, %v838
  %v1019 = vpack.c.b16 %v875, %v857
  %v1020 = vpack.c.b16 %v876, %v858
  %v1021 = vpack.c.b16 %v877, %v859
  %v1022 = vpack.c.b16 %v878, %v860
  %v1023 = vpack.c.b16 %v879, %v861
  %v1024 = vpack.c.b16 %v880, %v862
  %v1025 = vpack.c.b16 %v881, %v863
  %v1026 = vpack.c.b16 %v882, %v864
  %v1027 = vpack.c.b16 %v883, %v865
  %v1028 = vpack.c.b16 %v884, %v866
  %v1029 = vpack.c.b16 %v885, %v867
  %v1030 = vpack.c.b16 %v886, %v868
  %v1031 = vpack.c.b16 %v887, %v869
  %v1032 = vpack.c.b16 %v888, %v870
  %v1033 = vpack.c.b16 %v889, %v871
  %v1034 = vpack.c.b16 %v890, %v872
  %v1035 = vpack.c.b16 %v891, %v873
  %v1036 = vpack.c.b16 %v892, %v874
  %1181 = vmatprep.subr.bf16.mxu0 %v894
  %1182 = vmatpush1.bf16.msra.mxu0 %v893
  %1183 = vmatprep.subr.bf16.mxu0 %v912
  %1184 = vmatpush1.bf16.msra.mxu0 %v911
  %1185 = vmatprep.subr.bf16.mxu0 %v930
  %1186 = vmatpush1.bf16.msra.mxu0 %v929
  %1187 = vmatprep.subr.bf16.mxu0 %v948
  %1188 = vmatpush1.bf16.msra.mxu0 %v947
  %1189 = vmatprep.subr.bf16.mxu0 %v966
  %1190 = vmatpush1.bf16.msra.mxu0 %v965
  %1191 = vmatprep.subr.bf16.mxu0 %v984
  %1192 = vmatpush1.bf16.msra.mxu0 %v983
  %1193 = vmatprep.subr.bf16.mxu0 %v1002
  %1194 = vmatpush1.bf16.msra.mxu0 %v1001
  %1195 = vmatprep.subr.bf16.mxu0 %v1020
  %1196 = vmatpush1.bf16.msra.mxu0 %v1019
  %1197 = vmatprep.subr.bf16.mxu0 0
  %1198 = vmatpush1.bf16.msra.mxu0 0
  %1199 = vmatprep.subr.bf16.mxu0 0
  %1200 = vmatpush1.bf16.msra.mxu0 0
  %1201 = vmatprep.subr.bf16.mxu0 0
  %1202 = vmatpush1.bf16.msra.mxu0 0
  %1203 = vmatprep.subr.bf16.mxu0 0
  %1204 = vmatpush1.bf16.msra.mxu0 0
  %1205 = vmatprep.subr.bf16.mxu0 0
  %1206 = vmatpush1.bf16.msra.mxu0 0
  %1207 = vmatprep.subr.bf16.mxu0 0
  %1208 = vmatpush1.bf16.msra.mxu0 0
  %1209 = vmatprep.subr.bf16.mxu0 0
  %1210 = vmatpush1.bf16.msra.mxu0 0
  %1211 = vmatprep.subr.bf16.mxu0 0
  %1212 = vmatpush1.bf16.msra.mxu0 0
  %1213 = vmatprep.mubr.bf16.mxu0 0
  %1214 = vmatmul.mubr.bf16.gmra.mrb[0].mxu0 %v220
  %v1215 = vpop.f32.mrb[0].mxu0
  %v1216 = vadd.f32 %v374, %v1215
  %v1217 = vpop.f32.mrb[0].mxu0
  %v1218 = vadd.f32 %v378, %v1217
  %v1219 = vpop.f32.mrb[0].mxu0
  %v1220 = vpop.f32.mrb[0].mxu0
  %1221 = vdwg.mxu0
  %1222 = vmatprep.subr.bf16.mxu0 %v896
  %1223 = vmatpush1.bf16.msra.mxu0 %v895
  %1224 = vmatprep.subr.bf16.mxu0 %v914
  %1225 = vmatpush1.bf16.msra.mxu0 %v913
  %1226 = vmatprep.subr.bf16.mxu0 %v932
  %1227 = vmatpush1.bf16.msra.mxu0 %v931
  %1228 = vmatprep.subr.bf16.mxu0 %v950
  %1229 = vmatpush1.bf16.msra.mxu0 %v949
  %1230 = vmatprep.subr.bf16.mxu0 %v968
  %1231 = vmatpush1.bf16.msra.mxu0 %v967
  %1232 = vmatprep.subr.bf16.mxu0 %v986
  %1233 = vmatpush1.bf16.msra.mxu0 %v985
  %1234 = vmatprep.subr.bf16.mxu0 %v1004
  %1235 = vmatpush1.bf16.msra.mxu0 %v1003
  %1236 = vmatprep.subr.bf16.mxu0 %v1022
  %1237 = vmatpush1.bf16.msra.mxu0 %v1021
  %1238 = vmatprep.subr.bf16.mxu0 0
  %1239 = vmatpush1.bf16.msra.mxu0 0
  %1240 = vmatprep.subr.bf16.mxu0 0
  %1241 = vmatpush1.bf16.msra.mxu0 0
  %1242 = vmatprep.subr.bf16.mxu0 0
  %1243 = vmatpush1.bf16.msra.mxu0 0
  %1244 = vmatprep.subr.bf16.mxu0 0
  %1245 = vmatpush1.bf16.msra.mxu0 0
  %1246 = vmatprep.subr.bf16.mxu0 0
  %1247 = vmatpush1.bf16.msra.mxu0 0
  %1248 = vmatprep.subr.bf16.mxu0 0
  %1249 = vmatpush1.bf16.msra.mxu0 0
  %1250 = vmatprep.subr.bf16.mxu0 0
  %1251 = vmatpush1.bf16.msra.mxu0 0
  %1252 = vmatprep.subr.bf16.mxu0 0
  %1253 = vmatpush1.bf16.msra.mxu0 0
  %1254 = vmatprep.mubr.bf16.mxu0 0
  %1255 = vmatmul.mubr.bf16.gmra.mrb[0].mxu0 %v220
  %v1256 = vpop.f32.mrb[0].mxu0
  %v1257 = vadd.f32 %v382, %v1256
  %v1258 = vpop.f32.mrb[0].mxu0
  %v1259 = vadd.f32 %v386, %v1258
  %v1260 = vpop.f32.mrb[0].mxu0
  %v1261 = vpop.f32.mrb[0].mxu0
  %1262 = vdwg.mxu0
  %1263 = vmatprep.subr.bf16.mxu0 %v898
  %1264 = vmatpush1.bf16.msra.mxu0 %v897
  %1265 = vmatprep.subr.bf16.mxu0 %v916
  %1266 = vmatpush1.bf16.msra.mxu0 %v915
  %1267 = vmatprep.subr.bf16.mxu0 %v934
  %1268 = vmatpush1.bf16.msra.mxu0 %v933
  %1269 = vmatprep.subr.bf16.mxu0 %v952
  %1270 = vmatpush1.bf16.msra.mxu0 %v951
  %1271 = vmatprep.subr.bf16.mxu0 %v970
  %1272 = vmatpush1.bf16.msra.mxu0 %v969
  %1273 = vmatprep.subr.bf16.mxu0 %v988
  %1274 = vmatpush1.bf16.msra.mxu0 %v987
  %1275 = vmatprep.subr.bf16.mxu0 %v1006
  %1276 = vmatpush1.bf16.msra.mxu0 %v1005
  %1277 = vmatprep.subr.bf16.mxu0 %v1024
  %1278 = vmatpush1.bf16.msra.mxu0 %v1023
  %1279 = vmatprep.subr.bf16.mxu0 0
  %1280 = vmatpush1.bf16.msra.mxu0 0
  %1281 = vmatprep.subr.bf16.mxu0 0
  %1282 = vmatpush1.bf16.msra.mxu0 0
  %1283 = vmatprep.subr.bf16.mxu0 0
  %1284 = vmatpush1.bf16.msra.mxu0 0
  %1285 = vmatprep.subr.bf16.mxu0 0
  %1286 = vmatpush1.bf16.msra.mxu0 0
  %1287 = vmatprep.subr.bf16.mxu0 0
  %1288 = vmatpush1.bf16.msra.mxu0 0
  %1289 = vmatprep.subr.bf16.mxu0 0
  %1290 = vmatpush1.bf16.msra.mxu0 0
  %1291 = vmatprep.subr.bf16.mxu0 0
  %1292 = vmatpush1.bf16.msra.mxu0 0
  %1293 = vmatprep.subr.bf16.mxu0 0
  %1294 = vmatpush1.bf16.msra.mxu0 0
  %1295 = vmatprep.mubr.bf16.mxu0 0
  %1296 = vmatmul.mubr.bf16.gmra.mrb[0].mxu0 %v220
  %v1297 = vpop.f32.mrb[0].mxu0
  %v1298 = vadd.f32 %v390, %v1297
  %v1299 = vpop.f32.mrb[0].mxu0
  %v1300 = vadd.f32 %v394, %v1299
  %v1301 = vpop.f32.mrb[0].mxu0
  %v1302 = vpop.f32.mrb[0].mxu0
  %1303 = vdwg.mxu0
  %1304 = vmatprep.subr.bf16.mxu0 %v900
  %1305 = vmatpush1.bf16.msra.mxu0 %v899
  %1306 = vmatprep.subr.bf16.mxu0 %v918
  %1307 = vmatpush1.bf16.msra.mxu0 %v917
  %1308 = vmatprep.subr.bf16.mxu0 %v936
  %1309 = vmatpush1.bf16.msra.mxu0 %v935
  %1310 = vmatprep.subr.bf16.mxu0 %v954
  %1311 = vmatpush1.bf16.msra.mxu0 %v953
  %1312 = vmatprep.subr.bf16.mxu0 %v972
  %1313 = vmatpush1.bf16.msra.mxu0 %v971
  %1314 = vmatprep.subr.bf16.mxu0 %v990
  %1315 = vmatpush1.bf16.msra.mxu0 %v989
  %1316 = vmatprep.subr.bf16.mxu0 %v1008
  %1317 = vmatpush1.bf16.msra.mxu0 %v1007
  %1318 = vmatprep.subr.bf16.mxu0 %v1026
  %1319 = vmatpush1.bf16.msra.mxu0 %v1025
  %1320 = vmatprep.subr.bf16.mxu0 0
  %1321 = vmatpush1.bf16.msra.mxu0 0
  %1322 = vmatprep.subr.bf16.mxu0 0
  %1323 = vmatpush1.bf16.msra.mxu0 0
  %1324 = vmatprep.subr.bf16.mxu0 0
  %1325 = vmatpush1.bf16.msra.mxu0 0
  %1326 = vmatprep.subr.bf16.mxu0 0
  %1327 = vmatpush1.bf16.msra.mxu0 0
  %1328 = vmatprep.subr.bf16.mxu0 0
  %1329 = vmatpush1.bf16.msra.mxu0 0
  %1330 = vmatprep.subr.bf16.mxu0 0
  %1331 = vmatpush1.bf16.msra.mxu0 0
  %1332 = vmatprep.subr.bf16.mxu0 0
  %1333 = vmatpush1.bf16.msra.mxu0 0
  %1334 = vmatprep.subr.bf16.mxu0 0
  %1335 = vmatpush1.bf16.msra.mxu0 0
  %1336 = vmatprep.mubr.bf16.mxu0 0
  %1337 = vmatmul.mubr.bf16.gmra.mrb[0].mxu0 %v220
  %v1338 = vpop.f32.mrb[0].mxu0
  %v1339 = vadd.f32 %v398, %v1338
  %v1340 = vpop.f32.mrb[0].mxu0
  %v1341 = vadd.f32 %v402, %v1340
  %v1342 = vpop.f32.mrb[0].mxu0
  %v1343 = vpop.f32.mrb[0].mxu0
  %1344 = vdwg.mxu0
  %1345 = vmatprep.subr.bf16.mxu0 %v902
  %1346 = vmatpush1.bf16.msra.mxu0 %v901
  %1347 = vmatprep.subr.bf16.mxu0 %v920
  %1348 = vmatpush1.bf16.msra.mxu0 %v919
  %1349 = vmatprep.subr.bf16.mxu0 %v938
  %1350 = vmatpush1.bf16.msra.mxu0 %v937
  %1351 = vmatprep.subr.bf16.mxu0 %v956
  %1352 = vmatpush1.bf16.msra.mxu0 %v955
  %1353 = vmatprep.subr.bf16.mxu0 %v974
  %1354 = vmatpush1.bf16.msra.mxu0 %v973
  %1355 = vmatprep.subr.bf16.mxu0 %v992
  %1356 = vmatpush1.bf16.msra.mxu0 %v991
  %1357 = vmatprep.subr.bf16.mxu0 %v1010
  %1358 = vmatpush1.bf16.msra.mxu0 %v1009
  %1359 = vmatprep.subr.bf16.mxu0 %v1028
  %1360 = vmatpush1.bf16.msra.mxu0 %v1027
  %1361 = vmatprep.subr.bf16.mxu0 0
  %1362 = vmatpush1.bf16.msra.mxu0 0
  %1363 = vmatprep.subr.bf16.mxu0 0
  %1364 = vmatpush1.bf16.msra.mxu0 0
  %1365 = vmatprep.subr.bf16.mxu0 0
  %1366 = vmatpush1.bf16.msra.mxu0 0
  %1367 = vmatprep.subr.bf16.mxu0 0
  %1368 = vmatpush1.bf16.msra.mxu0 0
  %1369 = vmatprep.subr.bf16.mxu0 0
  %1370 = vmatpush1.bf16.msra.mxu0 0
  %1371 = vmatprep.subr.bf16.mxu0 0
  %1372 = vmatpush1.bf16.msra.mxu0 0
  %1373 = vmatprep.subr.bf16.mxu0 0
  %1374 = vmatpush1.bf16.msra.mxu0 0
  %1375 = vmatprep.subr.bf16.mxu0 0
  %1376 = vmatpush1.bf16.msra.mxu0 0
  %1377 = vmatprep.mubr.bf16.mxu0 0
  %1378 = vmatmul.mubr.bf16.gmra.mrb[0].mxu0 %v220
  %v1379 = vpop.f32.mrb[0].mxu0
  %v1380 = vadd.f32 %v406, %v1379
  %v1381 = vpop.f32.mrb[0].mxu0
  %v1382 = vadd.f32 %v410, %v1381
  %v1383 = vpop.f32.mrb[0].mxu0
  %v1384 = vpop.f32.mrb[0].mxu0
  %1385 = vdwg.mxu0
  %1386 = vmatprep.subr.bf16.mxu0 %v904
  %1387 = vmatpush1.bf16.msra.mxu0 %v903
  %1388 = vmatprep.subr.bf16.mxu0 %v922
  %1389 = vmatpush1.bf16.msra.mxu0 %v921
  %1390 = vmatprep.subr.bf16.mxu0 %v940
  %1391 = vmatpush1.bf16.msra.mxu0 %v939
  %1392 = vmatprep.subr.bf16.mxu0 %v958
  %1393 = vmatpush1.bf16.msra.mxu0 %v957
  %1394 = vmatprep.subr.bf16.mxu0 %v976
  %1395 = vmatpush1.bf16.msra.mxu0 %v975
  %1396 = vmatprep.subr.bf16.mxu0 %v994
  %1397 = vmatpush1.bf16.msra.mxu0 %v993
  %1398 = vmatprep.subr.bf16.mxu0 %v1012
  %1399 = vmatpush1.bf16.msra.mxu0 %v1011
  %1400 = vmatprep.subr.bf16.mxu0 %v1030
  %1401 = vmatpush1.bf16.msra.mxu0 %v1029
  %1402 = vmatprep.subr.bf16.mxu0 0
  %1403 = vmatpush1.bf16.msra.mxu0 0
  %1404 = vmatprep.subr.bf16.mxu0 0
  %1405 = vmatpush1.bf16.msra.mxu0 0
  %1406 = vmatprep.subr.bf16.mxu0 0
  %1407 = vmatpush1.bf16.msra.mxu0 0
  %1408 = vmatprep.subr.bf16.mxu0 0
  %1409 = vmatpush1.bf16.msra.mxu0 0
  %1410 = vmatprep.subr.bf16.mxu0 0
  %1411 = vmatpush1.bf16.msra.mxu0 0
  %1412 = vmatprep.subr.bf16.mxu0 0
  %1413 = vmatpush1.bf16.msra.mxu0 0
  %1414 = vmatprep.subr.bf16.mxu0 0
  %1415 = vmatpush1.bf16.msra.mxu0 0
  %1416 = vmatprep.subr.bf16.mxu0 0
  %1417 = vmatpush1.bf16.msra.mxu0 0
  %1418 = vmatprep.mubr.bf16.mxu0 0
  %1419 = vmatmul.mubr.bf16.gmra.mrb[0].mxu0 %v220
  %v1420 = vpop.f32.mrb[0].mxu0
  %v1421 = vadd.f32 %v414, %v1420
  %v1422 = vpop.f32.mrb[0].mxu0
  %v1423 = vadd.f32 %v418, %v1422
  %v1424 = vpop.f32.mrb[0].mxu0
  %v1425 = vpop.f32.mrb[0].mxu0
  %1426 = vdwg.mxu0
  %1427 = vmatprep.subr.bf16.mxu0 %v906
  %1428 = vmatpush1.bf16.msra.mxu0 %v905
  %1429 = vmatprep.subr.bf16.mxu0 %v924
  %1430 = vmatpush1.bf16.msra.mxu0 %v923
  %1431 = vmatprep.subr.bf16.mxu0 %v942
  %1432 = vmatpush1.bf16.msra.mxu0 %v941
  %1433 = vmatprep.subr.bf16.mxu0 %v960
  %1434 = vmatpush1.bf16.msra.mxu0 %v959
  %1435 = vmatprep.subr.bf16.mxu0 %v978
  %1436 = vmatpush1.bf16.msra.mxu0 %v977
  %1437 = vmatprep.subr.bf16.mxu0 %v996
  %1438 = vmatpush1.bf16.msra.mxu0 %v995
  %1439 = vmatprep.subr.bf16.mxu0 %v1014
  %1440 = vmatpush1.bf16.msra.mxu0 %v1013
  %1441 = vmatprep.subr.bf16.mxu0 %v1032
  %1442 = vmatpush1.bf16.msra.mxu0 %v1031
  %1443 = vmatprep.subr.bf16.mxu0 0
  %1444 = vmatpush1.bf16.msra.mxu0 0
  %1445 = vmatprep.subr.bf16.mxu0 0
  %1446 = vmatpush1.bf16.msra.mxu0 0
  %1447 = vmatprep.subr.bf16.mxu0 0
  %1448 = vmatpush1.bf16.msra.mxu0 0
  %1449 = vmatprep.subr.bf16.mxu0 0
  %1450 = vmatpush1.bf16.msra.mxu0 0
  %1451 = vmatprep.subr.bf16.mxu0 0
  %1452 = vmatpush1.bf16.msra.mxu0 0
  %1453 = vmatprep.subr.bf16.mxu0 0
  %1454 = vmatpush1.bf16.msra.mxu0 0
  %1455 = vmatprep.subr.bf16.mxu0 0
  %1456 = vmatpush1.bf16.msra.mxu0 0
  %1457 = vmatprep.subr.bf16.mxu0 0
  %1458 = vmatpush1.bf16.msra.mxu0 0
  %1459 = vmatprep.mubr.bf16.mxu0 0
  %1460 = vmatmul.mubr.bf16.gmra.mrb[0].mxu0 %v220
  %v1461 = vpop.f32.mrb[0].mxu0
  %v1462 = vadd.f32 %v422, %v1461
  %v1463 = vpop.f32.mrb[0].mxu0
  %v1464 = vadd.f32 %v426, %v1463
  %v1465 = vpop.f32.mrb[0].mxu0
  %v1466 = vpop.f32.mrb[0].mxu0
  %1467 = vdwg.mxu0
  %1468 = vmatprep.subr.bf16.mxu0 %v908
  %1469 = vmatpush1.bf16.msra.mxu0 %v907
  %1470 = vmatprep.subr.bf16.mxu0 %v926
  %1471 = vmatpush1.bf16.msra.mxu0 %v925
  %1472 = vmatprep.subr.bf16.mxu0 %v944
  %1473 = vmatpush1.bf16.msra.mxu0 %v943
  %1474 = vmatprep.subr.bf16.mxu0 %v962
  %1475 = vmatpush1.bf16.msra.mxu0 %v961
  %1476 = vmatprep.subr.bf16.mxu0 %v980
  %1477 = vmatpush1.bf16.msra.mxu0 %v979
  %1478 = vmatprep.subr.bf16.mxu0 %v998
  %1479 = vmatpush1.bf16.msra.mxu0 %v997
  %1480 = vmatprep.subr.bf16.mxu0 %v1016
  %1481 = vmatpush1.bf16.msra.mxu0 %v1015
  %1482 = vmatprep.subr.bf16.mxu0 %v1034
  %1483 = vmatpush1.bf16.msra.mxu0 %v1033
  %1484 = vmatprep.subr.bf16.mxu0 0
  %1485 = vmatpush1.bf16.msra.mxu0 0
  %1486 = vmatprep.subr.bf16.mxu0 0
  %1487 = vmatpush1.bf16.msra.mxu0 0
  %1488 = vmatprep.subr.bf16.mxu0 0
  %1489 = vmatpush1.bf16.msra.mxu0 0
  %1490 = vmatprep.subr.bf16.mxu0 0
  %1491 = vmatpush1.bf16.msra.mxu0 0
  %1492 = vmatprep.subr.bf16.mxu0 0
  %1493 = vmatpush1.bf16.msra.mxu0 0
  %1494 = vmatprep.subr.bf16.mxu0 0
  %1495 = vmatpush1.bf16.msra.mxu0 0
  %1496 = vmatprep.subr.bf16.mxu0 0
  %1497 = vmatpush1.bf16.msra.mxu0 0
  %1498 = vmatprep.subr.bf16.mxu0 0
  %1499 = vmatpush1.bf16.msra.mxu0 0
  %1500 = vmatprep.mubr.bf16.mxu0 0
  %1501 = vmatmul.mubr.bf16.gmra.mrb[0].mxu0 %v220
  %v1502 = vpop.f32.mrb[0].mxu0
  %v1503 = vadd.f32 %v430, %v1502
  %v1504 = vpop.f32.mrb[0].mxu0
  %v1505 = vadd.f32 %v434, %v1504
  %v1506 = vpop.f32.mrb[0].mxu0
  %v1507 = vpop.f32.mrb[0].mxu0
  %1508 = vdwg.mxu0
  %1509 = vmatprep.subr.bf16.mxu0 %v910
  %1510 = vmatpush1.bf16.msra.mxu0 %v909
  %1511 = vmatprep.subr.bf16.mxu0 %v928
  %1512 = vmatpush1.bf16.msra.mxu0 %v927
  %1513 = vmatprep.subr.bf16.mxu0 %v946
  %1514 = vmatpush1.bf16.msra.mxu0 %v945
  %1515 = vmatprep.subr.bf16.mxu0 %v964
  %1516 = vmatpush1.bf16.msra.mxu0 %v963
  %1517 = vmatprep.subr.bf16.mxu0 %v982
  %1518 = vmatpush1.bf16.msra.mxu0 %v981
  %1519 = vmatprep.subr.bf16.mxu0 %v1000
  %1520 = vmatpush1.bf16.msra.mxu0 %v999
  %1521 = vmatprep.subr.bf16.mxu0 %v1018
  %1522 = vmatpush1.bf16.msra.mxu0 %v1017
  %1523 = vmatprep.subr.bf16.mxu0 %v1036
  %1524 = vmatpush1.bf16.msra.mxu0 %v1035
  %1525 = vmatprep.subr.bf16.mxu0 0
  %1526 = vmatpush1.bf16.msra.mxu0 0
  %1527 = vmatprep.subr.bf16.mxu0 0
  %1528 = vmatpush1.bf16.msra.mxu0 0
  %1529 = vmatprep.subr.bf16.mxu0 0
  %1530 = vmatpush1.bf16.msra.mxu0 0
  %1531 = vmatprep.subr.bf16.mxu0 0
  %1532 = vmatpush1.bf16.msra.mxu0 0
  %1533 = vmatprep.subr.bf16.mxu0 0
  %1534 = vmatpush1.bf16.msra.mxu0 0
  %1535 = vmatprep.subr.bf16.mxu0 0
  %1536 = vmatpush1.bf16.msra.mxu0 0
  %1537 = vmatprep.subr.bf16.mxu0 0
  %1538 = vmatpush1.bf16.msra.mxu0 0
  %1539 = vmatprep.subr.bf16.mxu0 0
  %1540 = vmatpush1.bf16.msra.mxu0 0
  %1541 = vmatprep.mubr.bf16.mxu0 0
  %1542 = vmatmul.mubr.bf16.gmra.mrb[0].mxu0 %v220
  %v1543 = vpop.f32.mrb[0].mxu0
  %v1544 = vadd.f32 %v438, %v1543
  %v1545 = vpop.f32.mrb[0].mxu0
  %v1546 = vadd.f32 %v442, %v1545
  %v1547 = vpop.f32.mrb[0].mxu0
  %v1548 = vpop.f32.mrb[0].mxu0
  %1549 = vdwg.mxu0
  %v1550 = vmax.f32 %v1216, 0.0
  %v1551 = vmax.f32 %v1218, 0.0
  %v1552 = vmax.f32 %v1257, 0.0
  %v1553 = vmax.f32 %v1259, 0.0
  %v1554 = vmax.f32 %v1298, 0.0
  %v1555 = vmax.f32 %v1300, 0.0
  %v1556 = vmax.f32 %v1339, 0.0
  %v1557 = vmax.f32 %v1341, 0.0
  %v1558 = vmax.f32 %v1380, 0.0
  %v1559 = vmax.f32 %v1382, 0.0
  %v1560 = vmax.f32 %v1421, 0.0
  %v1561 = vmax.f32 %v1423, 0.0
  %v1562 = vmax.f32 %v1462, 0.0
  %v1563 = vmax.f32 %v1464, 0.0
  %v1564 = vmax.f32 %v1503, 0.0
  %v1565 = vmax.f32 %v1505, 0.0
  %v1566 = vmax.f32 %v1544, 0.0
  %v1567 = vmax.f32 %v1546, 0.0
  %v1568 = vpack.c.bf16 %v1550, %v1550
  %v1569 = vpack.c.bf16 %v1551, %v1551
  %v1570 = vpack.c.bf16 %v1552, %v1552
  %v1571 = vpack.c.bf16 %v1553, %v1553
  %v1572 = vpack.c.bf16 %v1554, %v1554
  %v1573 = vpack.c.bf16 %v1555, %v1555
  %v1574 = vpack.c.bf16 %v1556, %v1556
  %v1575 = vpack.c.bf16 %v1557, %v1557
  %v1576 = vpack.c.bf16 %v1558, %v1558
  %v1577 = vpack.c.bf16 %v1559, %v1559
  %v1578 = vpack.c.bf16 %v1560, %v1560
  %v1579 = vpack.c.bf16 %v1561, %v1561
  %v1580 = vpack.c.bf16 %v1562, %v1562
  %v1581 = vpack.c.bf16 %v1563, %v1563
  %v1582 = vpack.c.bf16 %v1564, %v1564
  %v1583 = vpack.c.bf16 %v1565, %v1565
  %v1584 = vpack.c.bf16 %v1566, %v1566
  %v1585 = vpack.c.bf16 %v1567, %v1567
  %v1586 = vld [vmem:[%s5] sm:$0xf]
  %v1587 = vld [vmem:[%s5 + $0x4] sm:$0xf]
  %v1588 = vld [vmem:[%s5 + $0x8] sm:$0xf]
  %v1589 = vld [vmem:[%s5 + $0xc] sm:$0xf]
  %v1590 = vld [vmem:[%s5 + $0x10] sm:$0xf]
  %v1591 = vld [vmem:[%s5 + $0x14] sm:$0xf]
  %v1592 = vld [vmem:[%s5 + $0x18] sm:$0xf]
  %v1593 = vld [vmem:[%s5 + $0x1c] sm:$0xf]
  %v1594 = vld [vmem:[%s5 + $0x20] sm:$0xf]
  %v1595 = vld [vmem:[%s5 + $0x24] sm:$0xf]
  %v1596 = vld [vmem:[%s5 + $0x28] sm:$0xf]
  %v1597 = vld [vmem:[%s5 + $0x2c] sm:$0xf]
  %v1598 = vld [vmem:[%s5 + $0x30] sm:$0xf]
  %v1599 = vld [vmem:[%s5 + $0x34] sm:$0xf]
  %v1600 = vld [vmem:[%s5 + $0x38] sm:$0xf]
  %v1601 = vld [vmem:[%s5 + $0x3c] sm:$0xf]
  %v1602 = vld [vmem:[%s5 + $0x40] sm:$0xf]
  %v1603 = vld [vmem:[%s5 + $0x44] sm:$0xf]
  %v1604 = vld [vmem:[%s5 + $0x48] sm:$0xf]
  %v1605 = vld [vmem:[%s5 + $0x4c] sm:$0xf]
  %v1606 = vld [vmem:[%s5 + $0x50] sm:$0xf]
  %v1607 = vld [vmem:[%s5 + $0x54] sm:$0xf]
  %v1608 = vld [vmem:[%s5 + $0x58] sm:$0xf]
  %v1609 = vld [vmem:[%s5 + $0x5c] sm:$0xf]
  %v1610 = vld [vmem:[%s5 + $0x60] sm:$0xf]
  %v1611 = vld [vmem:[%s5 + $0x64] sm:$0xf]
  %v1612 = vld [vmem:[%s5 + $0x68] sm:$0xf]
  %v1613 = vld [vmem:[%s5 + $0x6c] sm:$0xf]
  %v1614 = vld [vmem:[%s5 + $0x70] sm:$0xf]
  %v1615 = vld [vmem:[%s5 + $0x74] sm:$0xf]
  %v1616 = vld [vmem:[%s5 + $0x78] sm:$0xf]
  %v1617 = vld [vmem:[%s5 + $0x7c] sm:$0xf]
  %v1618 = vld [vmem:[%s5 + $0x80] sm:$0xf]
  %v1619 = vld [vmem:[%s5 + $0x84] sm:$0xf]
  %v1620 = vld [vmem:[%s5 + $0x88] sm:$0xf]
  %v1621 = vld [vmem:[%s5 + $0x8c] sm:$0xf]
  %v1622 = vld [vmem:[%s5 + $0x90] sm:$0xf]
  %v1623 = vld [vmem:[%s5 + $0x94] sm:$0xf]
  %v1624 = vld [vmem:[%s5 + $0x98] sm:$0xf]
  %v1625 = vld [vmem:[%s5 + $0x9c] sm:$0xf]
  %v1626 = vld [vmem:[%s5 + $0xa0] sm:$0xf]
  %v1627 = vld [vmem:[%s5 + $0xa4] sm:$0xf]
  %v1628 = vld [vmem:[%s5 + $0xa8] sm:$0xf]
  %v1629 = vld [vmem:[%s5 + $0xac] sm:$0xf]
  %v1630 = vld [vmem:[%s5 + $0xb0] sm:$0xf]
  %v1631 = vld [vmem:[%s5 + $0xb4] sm:$0xf]
  %v1632 = vld [vmem:[%s5 + $0xb8] sm:$0xf]
  %v1633 = vld [vmem:[%s5 + $0xbc] sm:$0xf]
  %v1634 = vld [vmem:[%s5 + $0xc0] sm:$0xf]
  %v1635 = vld [vmem:[%s5 + $0xc4] sm:$0xf]
  %v1636 = vld [vmem:[%s5 + $0xc8] sm:$0xf]
  %v1637 = vld [vmem:[%s5 + $0xcc] sm:$0xf]
  %v1638 = vld [vmem:[%s5 + $0xd0] sm:$0xf]
  %v1639 = vld [vmem:[%s5 + $0xd4] sm:$0xf]
  %v1640 = vld [vmem:[%s5 + $0xd8] sm:$0xf]
  %v1641 = vld [vmem:[%s5 + $0xdc] sm:$0xf]
  %v1642 = vld [vmem:[%s5 + $0xe0] sm:$0xf]
  %v1643 = vld [vmem:[%s5 + $0xe4] sm:$0xf]
  %v1644 = vld [vmem:[%s5 + $0xe8] sm:$0xf]
  %v1645 = vld [vmem:[%s5 + $0xec] sm:$0xf]
  %v1646 = vld [vmem:[%s5 + $0xf0] sm:$0xf]
  %v1647 = vld [vmem:[%s5 + $0xf4] sm:$0xf]
  %v1648 = vld [vmem:[%s5 + $0xf8] sm:$0xf]
  %v1649 = vld [vmem:[%s5 + $0xfc] sm:$0xf]
  %v1650 = vld [vmem:[%s5 + $0x100] sm:$0xf]
  %v1651 = vld [vmem:[%s5 + $0x104] sm:$0xf]
  %v1652 = vld [vmem:[%s5 + $0x108] sm:$0xf]
  %v1653 = vld [vmem:[%s5 + $0x10c] sm:$0xf]
  %v1654 = vld [vmem:[%s5 + $0x110] sm:$0xf]
  %v1655 = vld [vmem:[%s5 + $0x114] sm:$0xf]
  %v1656 = vld [vmem:[%s5 + $0x118] sm:$0xf]
  %v1657 = vld [vmem:[%s5 + $0x11c] sm:$0xf]
  %v1658 = vld [vmem:[%s5 + $0x120] sm:$0xf]
  %v1659 = vld [vmem:[%s5 + $0x124] sm:$0xf]
  %v1660 = vld [vmem:[%s5 + $0x128] sm:$0xf]
  %v1661 = vld [vmem:[%s5 + $0x12c] sm:$0xf]
  %v1662 = vld [vmem:[%s5 + $0x130] sm:$0xf]
  %v1663 = vld [vmem:[%s5 + $0x134] sm:$0xf]
  %v1664 = vld [vmem:[%s5 + $0x138] sm:$0xf]
  %v1665 = vld [vmem:[%s5 + $0x13c] sm:$0xf]
  %v1666 = vld [vmem:[%s5 + $0x140] sm:$0xf]
  %v1667 = vld [vmem:[%s5 + $0x144] sm:$0xf]
  %v1668 = vld [vmem:[%s5 + $0x148] sm:$0xf]
  %v1669 = vld [vmem:[%s5 + $0x14c] sm:$0xf]
  %v1670 = vld [vmem:[%s5 + $0x150] sm:$0xf]
  %v1671 = vld [vmem:[%s5 + $0x154] sm:$0xf]
  %v1672 = vld [vmem:[%s5 + $0x158] sm:$0xf]
  %v1673 = vld [vmem:[%s5 + $0x15c] sm:$0xf]
  %v1674 = vld [vmem:[%s5 + $0x160] sm:$0xf]
  %v1675 = vld [vmem:[%s5 + $0x164] sm:$0xf]
  %v1676 = vld [vmem:[%s5 + $0x168] sm:$0xf]
  %v1677 = vld [vmem:[%s5 + $0x16c] sm:$0xf]
  %v1678 = vld [vmem:[%s5 + $0x170] sm:$0xf]
  %v1679 = vld [vmem:[%s5 + $0x174] sm:$0xf]
  %v1680 = vld [vmem:[%s5 + $0x178] sm:$0xf]
  %v1681 = vld [vmem:[%s5 + $0x17c] sm:$0xf]
  %v1682 = vld [vmem:[%s5 + $0x180] sm:$0xf]
  %v1683 = vld [vmem:[%s5 + $0x184] sm:$0xf]
  %v1684 = vld [vmem:[%s5 + $0x188] sm:$0xf]
  %v1685 = vld [vmem:[%s5 + $0x18c] sm:$0xf]
  %v1686 = vld [vmem:[%s5 + $0x190] sm:$0xf]
  %v1687 = vld [vmem:[%s5 + $0x194] sm:$0xf]
  %v1688 = vld [vmem:[%s5 + $0x198] sm:$0xf]
  %v1689 = vld [vmem:[%s5 + $0x19c] sm:$0xf]
  %v1690 = vld [vmem:[%s5 + $0x1a0] sm:$0xf]
  %v1691 = vld [vmem:[%s5 + $0x1a4] sm:$0xf]
  %v1692 = vld [vmem:[%s5 + $0x1a8] sm:$0xf]
  %v1693 = vld [vmem:[%s5 + $0x1ac] sm:$0xf]
  %v1694 = vld [vmem:[%s5 + $0x1b0] sm:$0xf]
  %v1695 = vld [vmem:[%s5 + $0x1b4] sm:$0xf]
  %v1696 = vld [vmem:[%s5 + $0x1b8] sm:$0xf]
  %v1697 = vld [vmem:[%s5 + $0x1bc] sm:$0xf]
  %v1698 = vld [vmem:[%s5 + $0x1c0] sm:$0xf]
  %v1699 = vld [vmem:[%s5 + $0x1c4] sm:$0xf]
  %v1700 = vld [vmem:[%s5 + $0x1c8] sm:$0xf]
  %v1701 = vld [vmem:[%s5 + $0x1cc] sm:$0xf]
  %v1702 = vld [vmem:[%s5 + $0x1d0] sm:$0xf]
  %v1703 = vld [vmem:[%s5 + $0x1d4] sm:$0xf]
  %v1704 = vld [vmem:[%s5 + $0x1d8] sm:$0xf]
  %v1705 = vld [vmem:[%s5 + $0x1dc] sm:$0xf]
  %v1706 = vld [vmem:[%s5 + $0x1e0] sm:$0xf]
  %v1707 = vld [vmem:[%s5 + $0x1e4] sm:$0xf]
  %v1708 = vld [vmem:[%s5 + $0x1e8] sm:$0xf]
  %v1709 = vld [vmem:[%s5 + $0x1ec] sm:$0xf]
  %v1710 = vld [vmem:[%s5 + $0x1f0] sm:$0xf]
  %v1711 = vld [vmem:[%s5 + $0x1f4] sm:$0xf]
  %v1712 = vld [vmem:[%s5 + $0x1f8] sm:$0xf]
  %v1713 = vld [vmem:[%s5 + $0x1fc] sm:$0xf]
  %v1714 = vld [vmem:[%s5 + $0x200] sm:$0xf]
  %v1715 = vld [vmem:[%s5 + $0x204] sm:$0xf]
  %v1716 = vld [vmem:[%s5 + $0x208] sm:$0xf]
  %v1717 = vld [vmem:[%s5 + $0x20c] sm:$0xf]
  %v1718 = vld [vmem:[%s5 + $0x210] sm:$0xf]
  %v1719 = vld [vmem:[%s5 + $0x214] sm:$0xf]
  %v1720 = vld [vmem:[%s5 + $0x218] sm:$0xf]
  %v1721 = vld [vmem:[%s5 + $0x21c] sm:$0xf]
  %v1722 = vld [vmem:[%s5 + $0x220] sm:$0xf]
  %v1723 = vld [vmem:[%s5 + $0x224] sm:$0xf]
  %v1724 = vld [vmem:[%s5 + $0x228] sm:$0xf]
  %v1725 = vld [vmem:[%s5 + $0x22c] sm:$0xf]
  %v1726 = vld [vmem:[%s5 + $0x230] sm:$0xf]
  %v1727 = vld [vmem:[%s5 + $0x234] sm:$0xf]
  %v1728 = vld [vmem:[%s5 + $0x238] sm:$0xf]
  %v1729 = vld [vmem:[%s5 + $0x23c] sm:$0xf]
  %v1730 = vld [vmem:[%s5 + $0x240] sm:$0xf]
  %v1731 = vld [vmem:[%s5 + $0x244] sm:$0xf]
  %v1732 = vld [vmem:[%s5 + $0x248] sm:$0xf]
  %v1733 = vld [vmem:[%s5 + $0x24c] sm:$0xf]
  %v1734 = vld [vmem:[%s5 + $0x250] sm:$0xf]
  %v1735 = vld [vmem:[%s5 + $0x254] sm:$0xf]
  %v1736 = vld [vmem:[%s5 + $0x258] sm:$0xf]
  %v1737 = vld [vmem:[%s5 + $0x25c] sm:$0xf]
  %v1738 = vld [vmem:[%s5 + $0x260] sm:$0xf]
  %v1739 = vld [vmem:[%s5 + $0x264] sm:$0xf]
  %v1740 = vld [vmem:[%s5 + $0x268] sm:$0xf]
  %v1741 = vld [vmem:[%s5 + $0x26c] sm:$0xf]
  %v1742 = vld [vmem:[%s5 + $0x270] sm:$0xf]
  %v1743 = vld [vmem:[%s5 + $0x274] sm:$0xf]
  %v1744 = vld [vmem:[%s5 + $0x278] sm:$0xf]
  %v1745 = vld [vmem:[%s5 + $0x27c] sm:$0xf]
  %v1746 = vld [vmem:[%s5 + $0x280] sm:$0xf]
  %v1747 = vld [vmem:[%s5 + $0x284] sm:$0xf]
  %v1748 = vld [vmem:[%s5 + $0x288] sm:$0xf]
  %v1749 = vld [vmem:[%s5 + $0x28c] sm:$0xf]
  %v1750 = vld [vmem:[%s5 + $0x290] sm:$0xf]
  %v1751 = vld [vmem:[%s5 + $0x294] sm:$0xf]
  %v1752 = vld [vmem:[%s5 + $0x298] sm:$0xf]
  %v1753 = vld [vmem:[%s5 + $0x29c] sm:$0xf]
  %v1754 = vld [vmem:[%s5 + $0x2a0] sm:$0xf]
  %v1755 = vld [vmem:[%s5 + $0x2a4] sm:$0xf]
  %v1756 = vld [vmem:[%s5 + $0x2a8] sm:$0xf]
  %v1757 = vld [vmem:[%s5 + $0x2ac] sm:$0xf]
  %v1758 = vld [vmem:[%s5 + $0x2b0] sm:$0xf]
  %v1759 = vld [vmem:[%s5 + $0x2b4] sm:$0xf]
  %v1760 = vld [vmem:[%s5 + $0x2b8] sm:$0xf]
  %v1761 = vld [vmem:[%s5 + $0x2bc] sm:$0xf]
  %v1762 = vld [vmem:[%s5 + $0x2c0] sm:$0xf]
  %v1763 = vld [vmem:[%s5 + $0x2c4] sm:$0xf]
  %v1764 = vld [vmem:[%s5 + $0x2c8] sm:$0xf]
  %v1765 = vld [vmem:[%s5 + $0x2cc] sm:$0xf]
  %v1766 = vld [vmem:[%s5 + $0x2d0] sm:$0xf]
  %v1767 = vld [vmem:[%s5 + $0x2d4] sm:$0xf]
  %v1768 = vld [vmem:[%s5 + $0x2d8] sm:$0xf]
  %v1769 = vld [vmem:[%s5 + $0x2dc] sm:$0xf]
  %v1770 = vld [vmem:[%s5 + $0x2e0] sm:$0xf]
  %v1771 = vld [vmem:[%s5 + $0x2e4] sm:$0xf]
  %v1772 = vld [vmem:[%s5 + $0x2e8] sm:$0xf]
  %v1773 = vld [vmem:[%s5 + $0x2ec] sm:$0xf]
  %v1774 = vld [vmem:[%s5 + $0x2f0] sm:$0xf]
  %v1775 = vld [vmem:[%s5 + $0x2f4] sm:$0xf]
  %v1776 = vld [vmem:[%s5 + $0x2f8] sm:$0xf]
  %v1777 = vld [vmem:[%s5 + $0x2fc] sm:$0xf]
  %v1778 = vld [vmem:[%s5 + $0x300] sm:$0xf]
  %v1779 = vld [vmem:[%s5 + $0x304] sm:$0xf]
  %v1780 = vld [vmem:[%s5 + $0x308] sm:$0xf]
  %v1781 = vld [vmem:[%s5 + $0x30c] sm:$0xf]
  %v1782 = vld [vmem:[%s5 + $0x310] sm:$0xf]
  %v1783 = vld [vmem:[%s5 + $0x314] sm:$0xf]
  %v1784 = vld [vmem:[%s5 + $0x318] sm:$0xf]
  %v1785 = vld [vmem:[%s5 + $0x31c] sm:$0xf]
  %v1786 = vld [vmem:[%s5 + $0x320] sm:$0xf]
  %v1787 = vld [vmem:[%s5 + $0x324] sm:$0xf]
  %v1788 = vld [vmem:[%s5 + $0x328] sm:$0xf]
  %v1789 = vld [vmem:[%s5 + $0x32c] sm:$0xf]
  %v1790 = vld [vmem:[%s5 + $0x330] sm:$0xf]
  %v1791 = vld [vmem:[%s5 + $0x334] sm:$0xf]
  %v1792 = vld [vmem:[%s5 + $0x338] sm:$0xf]
  %v1793 = vld [vmem:[%s5 + $0x33c] sm:$0xf]
  %v1794 = vld [vmem:[%s5 + $0x340] sm:$0xf]
  %v1795 = vld [vmem:[%s5 + $0x344] sm:$0xf]
  %v1796 = vld [vmem:[%s5 + $0x348] sm:$0xf]
  %v1797 = vld [vmem:[%s5 + $0x34c] sm:$0xf]
  %v1798 = vld [vmem:[%s5 + $0x350] sm:$0xf]
  %v1799 = vld [vmem:[%s5 + $0x354] sm:$0xf]
  %v1800 = vld [vmem:[%s5 + $0x358] sm:$0xf]
  %v1801 = vld [vmem:[%s5 + $0x35c] sm:$0xf]
  %v1802 = vld [vmem:[%s5 + $0x360] sm:$0xf]
  %v1803 = vld [vmem:[%s5 + $0x364] sm:$0xf]
  %v1804 = vld [vmem:[%s5 + $0x368] sm:$0xf]
  %v1805 = vld [vmem:[%s5 + $0x36c] sm:$0xf]
  %v1806 = vld [vmem:[%s5 + $0x370] sm:$0xf]
  %v1807 = vld [vmem:[%s5 + $0x374] sm:$0xf]
  %v1808 = vld [vmem:[%s5 + $0x378] sm:$0xf]
  %v1809 = vld [vmem:[%s5 + $0x37c] sm:$0xf]
  %v1810 = vld [vmem:[%s5 + $0x380] sm:$0xf]
  %v1811 = vld [vmem:[%s5 + $0x384] sm:$0xf]
  %v1812 = vld [vmem:[%s5 + $0x388] sm:$0xf]
  %v1813 = vld [vmem:[%s5 + $0x38c] sm:$0xf]
  %v1814 = vld [vmem:[%s5 + $0x390] sm:$0xf]
  %v1815 = vld [vmem:[%s5 + $0x394] sm:$0xf]
  %v1816 = vld [vmem:[%s5 + $0x398] sm:$0xf]
  %v1817 = vld [vmem:[%s5 + $0x39c] sm:$0xf]
  %v1818 = vld [vmem:[%s5 + $0x3a0] sm:$0xf]
  %v1819 = vld [vmem:[%s5 + $0x3a4] sm:$0xf]
  %v1820 = vld [vmem:[%s5 + $0x3a8] sm:$0xf]
  %v1821 = vld [vmem:[%s5 + $0x3ac] sm:$0xf]
  %v1822 = vld [vmem:[%s5 + $0x3b0] sm:$0xf]
  %v1823 = vld [vmem:[%s5 + $0x3b4] sm:$0xf]
  %v1824 = vld [vmem:[%s5 + $0x3b8] sm:$0xf]
  %v1825 = vld [vmem:[%s5 + $0x3bc] sm:$0xf]
  %v1826 = vld [vmem:[%s5 + $0x3c0] sm:$0xf]
  %v1827 = vld [vmem:[%s5 + $0x3c4] sm:$0xf]
  %v1828 = vld [vmem:[%s5 + $0x3c8] sm:$0xf]
  %v1829 = vld [vmem:[%s5 + $0x3cc] sm:$0xf]
  %v1830 = vld [vmem:[%s5 + $0x3d0] sm:$0xf]
  %v1831 = vld [vmem:[%s5 + $0x3d4] sm:$0xf]
  %v1832 = vld [vmem:[%s5 + $0x3d8] sm:$0xf]
  %v1833 = vld [vmem:[%s5 + $0x3dc] sm:$0xf]
  %v1834 = vld [vmem:[%s5 + $0x3e0] sm:$0xf]
  %v1835 = vld [vmem:[%s5 + $0x3e4] sm:$0xf]
  %v1836 = vld [vmem:[%s5 + $0x3e8] sm:$0xf]
  %v1837 = vld [vmem:[%s5 + $0x3ec] sm:$0xf]
  %v1838 = vld [vmem:[%s5 + $0x3f0] sm:$0xf]
  %v1839 = vld [vmem:[%s5 + $0x3f4] sm:$0xf]
  %v1840 = vld [vmem:[%s5 + $0x3f8] sm:$0xf]
  %v1841 = vld [vmem:[%s5 + $0x3fc] sm:$0xf]
  %v1842 = vld [vmem:[%s5 + $0x400] sm:$0xf]
  %v1843 = vld [vmem:[%s5 + $0x404] sm:$0xf]
  %v1844 = vld [vmem:[%s5 + $0x408] sm:$0xf]
  %v1845 = vld [vmem:[%s5 + $0x40c] sm:$0xf]
  %v1846 = vld [vmem:[%s5 + $0x410] sm:$0xf]
  %v1847 = vld [vmem:[%s5 + $0x414] sm:$0xf]
  %v1848 = vld [vmem:[%s5 + $0x418] sm:$0xf]
  %v1849 = vld [vmem:[%s5 + $0x41c] sm:$0xf]
  %v1850 = vld [vmem:[%s5 + $0x420] sm:$0xf]
  %v1851 = vld [vmem:[%s5 + $0x424] sm:$0xf]
  %v1852 = vld [vmem:[%s5 + $0x428] sm:$0xf]
  %v1853 = vld [vmem:[%s5 + $0x42c] sm:$0xf]
  %v1854 = vld [vmem:[%s5 + $0x430] sm:$0xf]
  %v1855 = vld [vmem:[%s5 + $0x434] sm:$0xf]
  %v1856 = vld [vmem:[%s5 + $0x438] sm:$0xf]
  %v1857 = vld [vmem:[%s5 + $0x43c] sm:$0xf]
  %v1858 = vld [vmem:[%s5 + $0x440] sm:$0xf]
  %v1859 = vld [vmem:[%s5 + $0x444] sm:$0xf]
  %v1860 = vld [vmem:[%s5 + $0x448] sm:$0xf]
  %v1861 = vld [vmem:[%s5 + $0x44c] sm:$0xf]
  %v1862 = vld [vmem:[%s5 + $0x450] sm:$0xf]
  %v1863 = vld [vmem:[%s5 + $0x454] sm:$0xf]
  %v1864 = vld [vmem:[%s5 + $0x458] sm:$0xf]
  %v1865 = vld [vmem:[%s5 + $0x45c] sm:$0xf]
  %v1866 = vld [vmem:[%s5 + $0x460] sm:$0xf]
  %v1867 = vld [vmem:[%s5 + $0x464] sm:$0xf]
  %v1868 = vld [vmem:[%s5 + $0x468] sm:$0xf]
  %v1869 = vld [vmem:[%s5 + $0x46c] sm:$0xf]
  %v1870 = vld [vmem:[%s5 + $0x470] sm:$0xf]
  %v1871 = vld [vmem:[%s5 + $0x474] sm:$0xf]
  %v1872 = vld [vmem:[%s5 + $0x478] sm:$0xf]
  %v1873 = vld [vmem:[%s5 + $0x47c] sm:$0xf]
  %v1874 = vld [vmem:[%s6] sm:$0x1]
  %v1876 = vlaneseq
  %v1877 = vshrl.u32 %v1876, 7
  %v1878 = vsub.s32 0, %v1877
  %v1879 = vrot.slane %v1874, %v1878
  %v2169 = vunpack.c.l.b16 %v1586
  %v2170 = vunpack.c.l.b16 %v1587
  %v2171 = vunpack.c.l.b16 %v1588
  %v2172 = vunpack.c.l.b16 %v1589
  %v2173 = vunpack.c.l.b16 %v1590
  %v2174 = vunpack.c.l.b16 %v1591
  %v2175 = vunpack.c.l.b16 %v1592
  %v2176 = vunpack.c.l.b16 %v1593
  %v2177 = vunpack.c.l.b16 %v1594
  %v2178 = vunpack.c.l.b16 %v1595
  %v2179 = vunpack.c.l.b16 %v1596
  %v2180 = vunpack.c.l.b16 %v1597
  %v2181 = vunpack.c.l.b16 %v1598
  %v2182 = vunpack.c.l.b16 %v1599
  %v2183 = vunpack.c.l.b16 %v1600
  %v2184 = vunpack.c.l.b16 %v1601
  %v2185 = vunpack.c.l.b16 %v1602
  %v2186 = vunpack.c.l.b16 %v1603
  %v2187 = vunpack.c.l.b16 %v1604
  %v2188 = vunpack.c.l.b16 %v1605
  %v2189 = vunpack.c.l.b16 %v1606
  %v2190 = vunpack.c.l.b16 %v1607
  %v2191 = vunpack.c.l.b16 %v1608
  %v2192 = vunpack.c.l.b16 %v1609
  %v2193 = vunpack.c.l.b16 %v1610
  %v2194 = vunpack.c.l.b16 %v1611
  %v2195 = vunpack.c.l.b16 %v1612
  %v2196 = vunpack.c.l.b16 %v1613
  %v2197 = vunpack.c.l.b16 %v1614
  %v2198 = vunpack.c.l.b16 %v1615
  %v2199 = vunpack.c.l.b16 %v1616
  %v2200 = vunpack.c.l.b16 %v1617
  %v2201 = vunpack.c.l.b16 %v1618
  %v2202 = vunpack.c.l.b16 %v1619
  %v2203 = vunpack.c.l.b16 %v1620
  %v2204 = vunpack.c.l.b16 %v1621
  %v2205 = vunpack.c.l.b16 %v1622
  %v2206 = vunpack.c.l.b16 %v1623
  %v2207 = vunpack.c.l.b16 %v1624
  %v2208 = vunpack.c.l.b16 %v1625
  %v2209 = vunpack.c.l.b16 %v1626
  %v2210 = vunpack.c.l.b16 %v1627
  %v2211 = vunpack.c.l.b16 %v1628
  %v2212 = vunpack.c.l.b16 %v1629
  %v2213 = vunpack.c.l.b16 %v1630
  %v2214 = vunpack.c.l.b16 %v1631
  %v2215 = vunpack.c.l.b16 %v1632
  %v2216 = vunpack.c.l.b16 %v1633
  %v2217 = vunpack.c.l.b16 %v1634
  %v2218 = vunpack.c.l.b16 %v1635
  %v2219 = vunpack.c.l.b16 %v1636
  %v2220 = vunpack.c.l.b16 %v1637
  %v2221 = vunpack.c.l.b16 %v1638
  %v2222 = vunpack.c.l.b16 %v1639
  %v2223 = vunpack.c.l.b16 %v1640
  %v2224 = vunpack.c.l.b16 %v1641
  %v2225 = vunpack.c.l.b16 %v1642
  %v2226 = vunpack.c.l.b16 %v1643
  %v2227 = vunpack.c.l.b16 %v1644
  %v2228 = vunpack.c.l.b16 %v1645
  %v2229 = vunpack.c.l.b16 %v1646
  %v2230 = vunpack.c.l.b16 %v1647
  %v2231 = vunpack.c.l.b16 %v1648
  %v2232 = vunpack.c.l.b16 %v1649
  %v2233 = vunpack.c.l.b16 %v1650
  %v2234 = vunpack.c.l.b16 %v1651
  %v2235 = vunpack.c.l.b16 %v1652
  %v2236 = vunpack.c.l.b16 %v1653
  %v2237 = vunpack.c.l.b16 %v1654
  %v2238 = vunpack.c.l.b16 %v1655
  %v2239 = vunpack.c.l.b16 %v1656
  %v2240 = vunpack.c.l.b16 %v1657
  %v2241 = vunpack.c.l.b16 %v1658
  %v2242 = vunpack.c.l.b16 %v1659
  %v2243 = vunpack.c.l.b16 %v1660
  %v2244 = vunpack.c.l.b16 %v1661
  %v2245 = vunpack.c.l.b16 %v1662
  %v2246 = vunpack.c.l.b16 %v1663
  %v2247 = vunpack.c.l.b16 %v1664
  %v2248 = vunpack.c.l.b16 %v1665
  %v2249 = vunpack.c.l.b16 %v1666
  %v2250 = vunpack.c.l.b16 %v1667
  %v2251 = vunpack.c.l.b16 %v1668
  %v2252 = vunpack.c.l.b16 %v1669
  %v2253 = vunpack.c.l.b16 %v1670
  %v2254 = vunpack.c.l.b16 %v1671
  %v2255 = vunpack.c.l.b16 %v1672
  %v2256 = vunpack.c.l.b16 %v1673
  %v2257 = vunpack.c.l.b16 %v1674
  %v2258 = vunpack.c.l.b16 %v1675
  %v2259 = vunpack.c.l.b16 %v1676
  %v2260 = vunpack.c.l.b16 %v1677
  %v2261 = vunpack.c.l.b16 %v1678
  %v2262 = vunpack.c.l.b16 %v1679
  %v2263 = vunpack.c.l.b16 %v1680
  %v2264 = vunpack.c.l.b16 %v1681
  %v2265 = vunpack.c.l.b16 %v1682
  %v2266 = vunpack.c.l.b16 %v1683
  %v2267 = vunpack.c.l.b16 %v1684
  %v2268 = vunpack.c.l.b16 %v1685
  %v2269 = vunpack.c.l.b16 %v1686
  %v2270 = vunpack.c.l.b16 %v1687
  %v2271 = vunpack.c.l.b16 %v1688
  %v2272 = vunpack.c.l.b16 %v1689
  %v2273 = vunpack.c.l.b16 %v1690
  %v2274 = vunpack.c.l.b16 %v1691
  %v2275 = vunpack.c.l.b16 %v1692
  %v2276 = vunpack.c.l.b16 %v1693
  %v2277 = vunpack.c.l.b16 %v1694
  %v2278 = vunpack.c.l.b16 %v1695
  %v2279 = vunpack.c.l.b16 %v1696
  %v2280 = vunpack.c.l.b16 %v1697
  %v2281 = vunpack.c.l.b16 %v1698
  %v2282 = vunpack.c.l.b16 %v1699
  %v2283 = vunpack.c.l.b16 %v1700
  %v2284 = vunpack.c.l.b16 %v1701
  %v2285 = vunpack.c.l.b16 %v1702
  %v2286 = vunpack.c.l.b16 %v1703
  %v2287 = vunpack.c.l.b16 %v1704
  %v2288 = vunpack.c.l.b16 %v1705
  %v2289 = vunpack.c.l.b16 %v1706
  %v2290 = vunpack.c.l.b16 %v1707
  %v2291 = vunpack.c.l.b16 %v1708
  %v2292 = vunpack.c.l.b16 %v1709
  %v2293 = vunpack.c.l.b16 %v1710
  %v2294 = vunpack.c.l.b16 %v1711
  %v2295 = vunpack.c.l.b16 %v1712
  %v2296 = vunpack.c.l.b16 %v1713
  %v2297 = vunpack.c.l.b16 %v1714
  %v2298 = vunpack.c.l.b16 %v1715
  %v2299 = vunpack.c.l.b16 %v1716
  %v2300 = vunpack.c.l.b16 %v1717
  %v2301 = vunpack.c.l.b16 %v1718
  %v2302 = vunpack.c.l.b16 %v1719
  %v2303 = vunpack.c.l.b16 %v1720
  %v2304 = vunpack.c.l.b16 %v1721
  %v2305 = vunpack.c.l.b16 %v1722
  %v2306 = vunpack.c.l.b16 %v1723
  %v2307 = vunpack.c.l.b16 %v1724
  %v2308 = vunpack.c.l.b16 %v1725
  %v2309 = vunpack.c.l.b16 %v1726
  %v2310 = vunpack.c.l.b16 %v1727
  %v2311 = vunpack.c.l.b16 %v1728
  %v2312 = vunpack.c.l.b16 %v1729
  %v2313 = vunpack.c.l.b16 %v1730
  %v2314 = vunpack.c.l.b16 %v1731
  %v2315 = vunpack.c.l.b16 %v1732
  %v2316 = vunpack.c.l.b16 %v1733
  %v2317 = vunpack.c.l.b16 %v1734
  %v2318 = vunpack.c.l.b16 %v1735
  %v2319 = vunpack.c.l.b16 %v1736
  %v2320 = vunpack.c.l.b16 %v1737
  %v2321 = vunpack.c.l.b16 %v1738
  %v2322 = vunpack.c.l.b16 %v1739
  %v2323 = vunpack.c.l.b16 %v1740
  %v2324 = vunpack.c.l.b16 %v1741
  %v2325 = vunpack.c.l.b16 %v1742
  %v2326 = vunpack.c.l.b16 %v1743
  %v2327 = vunpack.c.l.b16 %v1744
  %v2328 = vunpack.c.l.b16 %v1745
  %v2329 = vunpack.c.l.b16 %v1746
  %v2330 = vunpack.c.l.b16 %v1747
  %v2331 = vunpack.c.l.b16 %v1748
  %v2332 = vunpack.c.l.b16 %v1749
  %v2333 = vunpack.c.l.b16 %v1750
  %v2334 = vunpack.c.l.b16 %v1751
  %v2335 = vunpack.c.l.b16 %v1752
  %v2336 = vunpack.c.l.b16 %v1753
  %v2337 = vunpack.c.l.b16 %v1754
  %v2338 = vunpack.c.l.b16 %v1755
  %v2339 = vunpack.c.l.b16 %v1756
  %v2340 = vunpack.c.l.b16 %v1757
  %v2341 = vunpack.c.l.b16 %v1758
  %v2342 = vunpack.c.l.b16 %v1759
  %v2343 = vunpack.c.l.b16 %v1760
  %v2344 = vunpack.c.l.b16 %v1761
  %v2345 = vunpack.c.l.b16 %v1762
  %v2346 = vunpack.c.l.b16 %v1763
  %v2347 = vunpack.c.l.b16 %v1764
  %v2348 = vunpack.c.l.b16 %v1765
  %v2349 = vunpack.c.l.b16 %v1766
  %v2350 = vunpack.c.l.b16 %v1767
  %v2351 = vunpack.c.l.b16 %v1768
  %v2352 = vunpack.c.l.b16 %v1769
  %v2353 = vunpack.c.l.b16 %v1770
  %v2354 = vunpack.c.l.b16 %v1771
  %v2355 = vunpack.c.l.b16 %v1772
  %v2356 = vunpack.c.l.b16 %v1773
  %v2357 = vunpack.c.l.b16 %v1774
  %v2358 = vunpack.c.l.b16 %v1775
  %v2359 = vunpack.c.l.b16 %v1776
  %v2360 = vunpack.c.l.b16 %v1777
  %v2361 = vunpack.c.l.b16 %v1778
  %v2362 = vunpack.c.l.b16 %v1779
  %v2363 = vunpack.c.l.b16 %v1780
  %v2364 = vunpack.c.l.b16 %v1781
  %v2365 = vunpack.c.l.b16 %v1782
  %v2366 = vunpack.c.l.b16 %v1783
  %v2367 = vunpack.c.l.b16 %v1784
  %v2368 = vunpack.c.l.b16 %v1785
  %v2369 = vunpack.c.l.b16 %v1786
  %v2370 = vunpack.c.l.b16 %v1787
  %v2371 = vunpack.c.l.b16 %v1788
  %v2372 = vunpack.c.l.b16 %v1789
  %v2373 = vunpack.c.l.b16 %v1790
  %v2374 = vunpack.c.l.b16 %v1791
  %v2375 = vunpack.c.l.b16 %v1792
  %v2376 = vunpack.c.l.b16 %v1793
  %v2377 = vunpack.c.l.b16 %v1794
  %v2378 = vunpack.c.l.b16 %v1795
  %v2379 = vunpack.c.l.b16 %v1796
  %v2380 = vunpack.c.l.b16 %v1797
  %v2381 = vunpack.c.l.b16 %v1798
  %v2382 = vunpack.c.l.b16 %v1799
  %v2383 = vunpack.c.l.b16 %v1800
  %v2384 = vunpack.c.l.b16 %v1801
  %v2385 = vunpack.c.l.b16 %v1802
  %v2386 = vunpack.c.l.b16 %v1803
  %v2387 = vunpack.c.l.b16 %v1804
  %v2388 = vunpack.c.l.b16 %v1805
  %v2389 = vunpack.c.l.b16 %v1806
  %v2390 = vunpack.c.l.b16 %v1807
  %v2391 = vunpack.c.l.b16 %v1808
  %v2392 = vunpack.c.l.b16 %v1809
  %v2393 = vunpack.c.l.b16 %v1810
  %v2394 = vunpack.c.l.b16 %v1811
  %v2395 = vunpack.c.l.b16 %v1812
  %v2396 = vunpack.c.l.b16 %v1813
  %v2397 = vunpack.c.l.b16 %v1814
  %v2398 = vunpack.c.l.b16 %v1815
  %v2399 = vunpack.c.l.b16 %v1816
  %v2400 = vunpack.c.l.b16 %v1817
  %v2401 = vunpack.c.l.b16 %v1818
  %v2402 = vunpack.c.l.b16 %v1819
  %v2403 = vunpack.c.l.b16 %v1820
  %v2404 = vunpack.c.l.b16 %v1821
  %v2405 = vunpack.c.l.b16 %v1822
  %v2406 = vunpack.c.l.b16 %v1823
  %v2407 = vunpack.c.l.b16 %v1824
  %v2408 = vunpack.c.l.b16 %v1825
  %v2409 = vunpack.c.l.b16 %v1826
  %v2410 = vunpack.c.l.b16 %v1827
  %v2411 = vunpack.c.l.b16 %v1828
  %v2412 = vunpack.c.l.b16 %v1829
  %v2413 = vunpack.c.l.b16 %v1830
  %v2414 = vunpack.c.l.b16 %v1831
  %v2415 = vunpack.c.l.b16 %v1832
  %v2416 = vunpack.c.l.b16 %v1833
  %v2417 = vunpack.c.l.b16 %v1834
  %v2418 = vunpack.c.l.b16 %v1835
  %v2419 = vunpack.c.l.b16 %v1836
  %v2420 = vunpack.c.l.b16 %v1837
  %v2421 = vunpack.c.l.b16 %v1838
  %v2422 = vunpack.c.l.b16 %v1839
  %v2423 = vunpack.c.l.b16 %v1840
  %v2424 = vunpack.c.l.b16 %v1841
  %v2425 = vunpack.c.l.b16 %v1842
  %v2426 = vunpack.c.l.b16 %v1843
  %v2427 = vunpack.c.l.b16 %v1844
  %v2428 = vunpack.c.l.b16 %v1845
  %v2429 = vunpack.c.l.b16 %v1846
  %v2430 = vunpack.c.l.b16 %v1847
  %v2431 = vunpack.c.l.b16 %v1848
  %v2432 = vunpack.c.l.b16 %v1849
  %v2433 = vunpack.c.l.b16 %v1850
  %v2434 = vunpack.c.l.b16 %v1851
  %v2435 = vunpack.c.l.b16 %v1852
  %v2436 = vunpack.c.l.b16 %v1853
  %v2437 = vunpack.c.l.b16 %v1854
  %v2438 = vunpack.c.l.b16 %v1855
  %v2439 = vunpack.c.l.b16 %v1856
  %v2440 = vunpack.c.l.b16 %v1857
  %v2441 = vunpack.c.l.b16 %v1858
  %v2442 = vunpack.c.l.b16 %v1859
  %v2443 = vunpack.c.l.b16 %v1860
  %v2444 = vunpack.c.l.b16 %v1861
  %v2445 = vunpack.c.l.b16 %v1862
  %v2446 = vunpack.c.l.b16 %v1863
  %v2447 = vunpack.c.l.b16 %v1864
  %v2448 = vunpack.c.l.b16 %v1865
  %v2449 = vunpack.c.l.b16 %v1866
  %v2450 = vunpack.c.l.b16 %v1867
  %v2451 = vunpack.c.l.b16 %v1868
  %v2452 = vunpack.c.l.b16 %v1869
  %v2453 = vunpack.c.l.b16 %v1870
  %v2454 = vunpack.c.l.b16 %v1871
  %v2455 = vunpack.c.l.b16 %v1872
  %v2456 = vunpack.c.l.b16 %v1873
  %v2457 = vpack.c.b16 %v2170, %v2169
  %v2458 = vpack.c.b16 %v2172, %v2171
  %v2459 = vpack.c.b16 %v2174, %v2173
  %v2460 = vpack.c.b16 %v2176, %v2175
  %v2461 = vpack.c.b16 %v2178, %v2177
  %v2462 = vpack.c.b16 %v2180, %v2179
  %v2463 = vpack.c.b16 %v2182, %v2181
  %v2464 = vpack.c.b16 %v2184, %v2183
  %v2465 = vpack.c.b16 %v2186, %v2185
  %v2466 = vpack.c.b16 %v2188, %v2187
  %v2467 = vpack.c.b16 %v2190, %v2189
  %v2468 = vpack.c.b16 %v2192, %v2191
  %v2469 = vpack.c.b16 %v2194, %v2193
  %v2470 = vpack.c.b16 %v2196, %v2195
  %v2471 = vpack.c.b16 %v2198, %v2197
  %v2472 = vpack.c.b16 %v2200, %v2199
  %v2473 = vpack.c.b16 %v2202, %v2201
  %v2474 = vpack.c.b16 %v2204, %v2203
  %v2475 = vpack.c.b16 %v2206, %v2205
  %v2476 = vpack.c.b16 %v2208, %v2207
  %v2477 = vpack.c.b16 %v2210, %v2209
  %v2478 = vpack.c.b16 %v2212, %v2211
  %v2479 = vpack.c.b16 %v2214, %v2213
  %v2480 = vpack.c.b16 %v2216, %v2215
  %v2481 = vpack.c.b16 %v2218, %v2217
  %v2482 = vpack.c.b16 %v2220, %v2219
  %v2483 = vpack.c.b16 %v2222, %v2221
  %v2484 = vpack.c.b16 %v2224, %v2223
  %v2485 = vpack.c.b16 %v2226, %v2225
  %v2486 = vpack.c.b16 %v2228, %v2227
  %v2487 = vpack.c.b16 %v2230, %v2229
  %v2488 = vpack.c.b16 %v2232, %v2231
  %v2489 = vpack.c.b16 %v2234, %v2233
  %v2490 = vpack.c.b16 %v2236, %v2235
  %v2491 = vpack.c.b16 %v2238, %v2237
  %v2492 = vpack.c.b16 %v2240, %v2239
  %v2493 = vpack.c.b16 %v2242, %v2241
  %v2494 = vpack.c.b16 %v2244, %v2243
  %v2495 = vpack.c.b16 %v2246, %v2245
  %v2496 = vpack.c.b16 %v2248, %v2247
  %v2497 = vpack.c.b16 %v2250, %v2249
  %v2498 = vpack.c.b16 %v2252, %v2251
  %v2499 = vpack.c.b16 %v2254, %v2253
  %v2500 = vpack.c.b16 %v2256, %v2255
  %v2501 = vpack.c.b16 %v2258, %v2257
  %v2502 = vpack.c.b16 %v2260, %v2259
  %v2503 = vpack.c.b16 %v2262, %v2261
  %v2504 = vpack.c.b16 %v2264, %v2263
  %v2505 = vpack.c.b16 %v2266, %v2265
  %v2506 = vpack.c.b16 %v2268, %v2267
  %v2507 = vpack.c.b16 %v2270, %v2269
  %v2508 = vpack.c.b16 %v2272, %v2271
  %v2509 = vpack.c.b16 %v2274, %v2273
  %v2510 = vpack.c.b16 %v2276, %v2275
  %v2511 = vpack.c.b16 %v2278, %v2277
  %v2512 = vpack.c.b16 %v2280, %v2279
  %v2513 = vpack.c.b16 %v2282, %v2281
  %v2514 = vpack.c.b16 %v2284, %v2283
  %v2515 = vpack.c.b16 %v2286, %v2285
  %v2516 = vpack.c.b16 %v2288, %v2287
  %v2517 = vpack.c.b16 %v2290, %v2289
  %v2518 = vpack.c.b16 %v2292, %v2291
  %v2519 = vpack.c.b16 %v2294, %v2293
  %v2520 = vpack.c.b16 %v2296, %v2295
  %v2521 = vpack.c.b16 %v2298, %v2297
  %v2522 = vpack.c.b16 %v2300, %v2299
  %v2523 = vpack.c.b16 %v2302, %v2301
  %v2524 = vpack.c.b16 %v2304, %v2303
  %v2525 = vpack.c.b16 %v2306, %v2305
  %v2526 = vpack.c.b16 %v2308, %v2307
  %v2527 = vpack.c.b16 %v2310, %v2309
  %v2528 = vpack.c.b16 %v2312, %v2311
  %v2529 = vpack.c.b16 %v2314, %v2313
  %v2530 = vpack.c.b16 %v2316, %v2315
  %v2531 = vpack.c.b16 %v2318, %v2317
  %v2532 = vpack.c.b16 %v2320, %v2319
  %v2533 = vpack.c.b16 %v2322, %v2321
  %v2534 = vpack.c.b16 %v2324, %v2323
  %v2535 = vpack.c.b16 %v2326, %v2325
  %v2536 = vpack.c.b16 %v2328, %v2327
  %v2537 = vpack.c.b16 %v2330, %v2329
  %v2538 = vpack.c.b16 %v2332, %v2331
  %v2539 = vpack.c.b16 %v2334, %v2333
  %v2540 = vpack.c.b16 %v2336, %v2335
  %v2541 = vpack.c.b16 %v2338, %v2337
  %v2542 = vpack.c.b16 %v2340, %v2339
  %v2543 = vpack.c.b16 %v2342, %v2341
  %v2544 = vpack.c.b16 %v2344, %v2343
  %v2545 = vpack.c.b16 %v2346, %v2345
  %v2546 = vpack.c.b16 %v2348, %v2347
  %v2547 = vpack.c.b16 %v2350, %v2349
  %v2548 = vpack.c.b16 %v2352, %v2351
  %v2549 = vpack.c.b16 %v2354, %v2353
  %v2550 = vpack.c.b16 %v2356, %v2355
  %v2551 = vpack.c.b16 %v2358, %v2357
  %v2552 = vpack.c.b16 %v2360, %v2359
  %v2553 = vpack.c.b16 %v2362, %v2361
  %v2554 = vpack.c.b16 %v2364, %v2363
  %v2555 = vpack.c.b16 %v2366, %v2365
  %v2556 = vpack.c.b16 %v2368, %v2367
  %v2557 = vpack.c.b16 %v2370, %v2369
  %v2558 = vpack.c.b16 %v2372, %v2371
  %v2559 = vpack.c.b16 %v2374, %v2373
  %v2560 = vpack.c.b16 %v2376, %v2375
  %v2561 = vpack.c.b16 %v2378, %v2377
  %v2562 = vpack.c.b16 %v2380, %v2379
  %v2563 = vpack.c.b16 %v2382, %v2381
  %v2564 = vpack.c.b16 %v2384, %v2383
  %v2565 = vpack.c.b16 %v2386, %v2385
  %v2566 = vpack.c.b16 %v2388, %v2387
  %v2567 = vpack.c.b16 %v2390, %v2389
  %v2568 = vpack.c.b16 %v2392, %v2391
  %v2569 = vpack.c.b16 %v2394, %v2393
  %v2570 = vpack.c.b16 %v2396, %v2395
  %v2571 = vpack.c.b16 %v2398, %v2397
  %v2572 = vpack.c.b16 %v2400, %v2399
  %v2573 = vpack.c.b16 %v2402, %v2401
  %v2574 = vpack.c.b16 %v2404, %v2403
  %v2575 = vpack.c.b16 %v2406, %v2405
  %v2576 = vpack.c.b16 %v2408, %v2407
  %v2577 = vpack.c.b16 %v2410, %v2409
  %v2578 = vpack.c.b16 %v2412, %v2411
  %v2579 = vpack.c.b16 %v2414, %v2413
  %v2580 = vpack.c.b16 %v2416, %v2415
  %v2581 = vpack.c.b16 %v2418, %v2417
  %v2582 = vpack.c.b16 %v2420, %v2419
  %v2583 = vpack.c.b16 %v2422, %v2421
  %v2584 = vpack.c.b16 %v2424, %v2423
  %v2585 = vpack.c.b16 %v2426, %v2425
  %v2586 = vpack.c.b16 %v2428, %v2427
  %v2587 = vpack.c.b16 %v2430, %v2429
  %v2588 = vpack.c.b16 %v2432, %v2431
  %v2589 = vpack.c.b16 %v2434, %v2433
  %v2590 = vpack.c.b16 %v2436, %v2435
  %v2591 = vpack.c.b16 %v2438, %v2437
  %v2592 = vpack.c.b16 %v2440, %v2439
  %v2593 = vpack.c.b16 %v2442, %v2441
  %v2594 = vpack.c.b16 %v2444, %v2443
  %v2595 = vpack.c.b16 %v2446, %v2445
  %v2596 = vpack.c.b16 %v2448, %v2447
  %v2597 = vpack.c.b16 %v2450, %v2449
  %v2598 = vpack.c.b16 %v2452, %v2451
  %v2599 = vpack.c.b16 %v2454, %v2453
  %v2600 = vpack.c.b16 %v2456, %v2455
  %2745 = vmatprep.subr.bf16.mxu0 0
  %2746 = vmatpush1.bf16.msra.mxu0 %v2457
  %2747 = vmatprep.subr.bf16.mxu0 0
  %2748 = vmatpush1.bf16.msra.mxu0 %v2458
  %2749 = vmatprep.subr.bf16.mxu0 0
  %2750 = vmatpush1.bf16.msra.mxu0 %v2459
  %2751 = vmatprep.subr.bf16.mxu0 0
  %2752 = vmatpush1.bf16.msra.mxu0 %v2460
  %2753 = vmatprep.subr.bf16.mxu0 0
  %2754 = vmatpush1.bf16.msra.mxu0 %v2461
  %2755 = vmatprep.subr.bf16.mxu0 0
  %2756 = vmatpush1.bf16.msra.mxu0 %v2462
  %2757 = vmatprep.subr.bf16.mxu0 0
  %2758 = vmatpush1.bf16.msra.mxu0 %v2463
  %2759 = vmatprep.subr.bf16.mxu0 0
  %2760 = vmatpush1.bf16.msra.mxu0 %v2464
  %2761 = vmatprep.subr.bf16.mxu0 0
  %2762 = vmatpush1.bf16.msra.mxu0 %v2465
  %2763 = vmatprep.subr.bf16.mxu0 0
  %2764 = vmatpush1.bf16.msra.mxu0 %v2466
  %2765 = vmatprep.subr.bf16.mxu0 0
  %2766 = vmatpush1.bf16.msra.mxu0 %v2467
  %2767 = vmatprep.subr.bf16.mxu0 0
  %2768 = vmatpush1.bf16.msra.mxu0 %v2468
  %2769 = vmatprep.subr.bf16.mxu0 0
  %2770 = vmatpush1.bf16.msra.mxu0 %v2469
  %2771 = vmatprep.subr.bf16.mxu0 0
  %2772 = vmatpush1.bf16.msra.mxu0 %v2470
  %2773 = vmatprep.subr.bf16.mxu0 0
  %2774 = vmatpush1.bf16.msra.mxu0 %v2471
  %2775 = vmatprep.subr.bf16.mxu0 0
  %2776 = vmatpush1.bf16.msra.mxu0 %v2472
  %2777 = vmatprep.mubr.bf16.mxu0 %v1569
  %2778 = vmatmul.mubr.bf16.gmra.mrb[0].mxu0 %v1568
  %v2779 = vpop.f32.mrb[0].mxu0
  %v2780 = vadd.f32 %v1879, %v2779
  %v2781 = vpop.f32.mrb[0].mxu0
  %v2782 = vpop.f32.mrb[0].mxu0
  %v2783 = vpop.f32.mrb[0].mxu0
  %2784 = vdwg.mxu0
  %2785 = vmatprep.subr.bf16.mxu0 0
  %2786 = vmatpush1.bf16.msra.mxu0 %v2473
  %2787 = vmatprep.subr.bf16.mxu0 0
  %2788 = vmatpush1.bf16.msra.mxu0 %v2474
  %2789 = vmatprep.subr.bf16.mxu0 0
  %2790 = vmatpush1.bf16.msra.mxu0 %v2475
  %2791 = vmatprep.subr.bf16.mxu0 0
  %2792 = vmatpush1.bf16.msra.mxu0 %v2476
  %2793 = vmatprep.subr.bf16.mxu0 0
  %2794 = vmatpush1.bf16.msra.mxu0 %v2477
  %2795 = vmatprep.subr.bf16.mxu0 0
  %2796 = vmatpush1.bf16.msra.mxu0 %v2478
  %2797 = vmatprep.subr.bf16.mxu0 0
  %2798 = vmatpush1.bf16.msra.mxu0 %v2479
  %2799 = vmatprep.subr.bf16.mxu0 0
  %2800 = vmatpush1.bf16.msra.mxu0 %v2480
  %2801 = vmatprep.subr.bf16.mxu0 0
  %2802 = vmatpush1.bf16.msra.mxu0 %v2481
  %2803 = vmatprep.subr.bf16.mxu0 0
  %2804 = vmatpush1.bf16.msra.mxu0 %v2482
  %2805 = vmatprep.subr.bf16.mxu0 0
  %2806 = vmatpush1.bf16.msra.mxu0 %v2483
  %2807 = vmatprep.subr.bf16.mxu0 0
  %2808 = vmatpush1.bf16.msra.mxu0 %v2484
  %2809 = vmatprep.subr.bf16.mxu0 0
  %2810 = vmatpush1.bf16.msra.mxu0 %v2485
  %2811 = vmatprep.subr.bf16.mxu0 0
  %2812 = vmatpush1.bf16.msra.mxu0 %v2486
  %2813 = vmatprep.subr.bf16.mxu0 0
  %2814 = vmatpush1.bf16.msra.mxu0 %v2487
  %2815 = vmatprep.subr.bf16.mxu0 0
  %2816 = vmatpush1.bf16.msra.mxu0 %v2488
  %2817 = vmatprep.mubr.bf16.mxu0 %v1571
  %2818 = vmatmul.mubr.bf16.gmra.mrb[0].mxu0 %v1570
  %v2819 = vpop.f32.mrb[0].mxu0
  %v2820 = vadd.f32 %v2780, %v2819
  %v2821 = vpop.f32.mrb[0].mxu0
  %v2822 = vpop.f32.mrb[0].mxu0
  %v2823 = vpop.f32.mrb[0].mxu0
  %2824 = vdwg.mxu0
  %2825 = vmatprep.subr.bf16.mxu0 0
  %2826 = vmatpush1.bf16.msra.mxu0 %v2489
  %2827 = vmatprep.subr.bf16.mxu0 0
  %2828 = vmatpush1.bf16.msra.mxu0 %v2490
  %2829 = vmatprep.subr.bf16.mxu0 0
  %2830 = vmatpush1.bf16.msra.mxu0 %v2491
  %2831 = vmatprep.subr.bf16.mxu0 0
  %2832 = vmatpush1.bf16.msra.mxu0 %v2492
  %2833 = vmatprep.subr.bf16.mxu0 0
  %2834 = vmatpush1.bf16.msra.mxu0 %v2493
  %2835 = vmatprep.subr.bf16.mxu0 0
  %2836 = vmatpush1.bf16.msra.mxu0 %v2494
  %2837 = vmatprep.subr.bf16.mxu0 0
  %2838 = vmatpush1.bf16.msra.mxu0 %v2495
  %2839 = vmatprep.subr.bf16.mxu0 0
  %2840 = vmatpush1.bf16.msra.mxu0 %v2496
  %2841 = vmatprep.subr.bf16.mxu0 0
  %2842 = vmatpush1.bf16.msra.mxu0 %v2497
  %2843 = vmatprep.subr.bf16.mxu0 0
  %2844 = vmatpush1.bf16.msra.mxu0 %v2498
  %2845 = vmatprep.subr.bf16.mxu0 0
  %2846 = vmatpush1.bf16.msra.mxu0 %v2499
  %2847 = vmatprep.subr.bf16.mxu0 0
  %2848 = vmatpush1.bf16.msra.mxu0 %v2500
  %2849 = vmatprep.subr.bf16.mxu0 0
  %2850 = vmatpush1.bf16.msra.mxu0 %v2501
  %2851 = vmatprep.subr.bf16.mxu0 0
  %2852 = vmatpush1.bf16.msra.mxu0 %v2502
  %2853 = vmatprep.subr.bf16.mxu0 0
  %2854 = vmatpush1.bf16.msra.mxu0 %v2503
  %2855 = vmatprep.subr.bf16.mxu0 0
  %2856 = vmatpush1.bf16.msra.mxu0 %v2504
  %2857 = vmatprep.mubr.bf16.mxu0 %v1573
  %2858 = vmatmul.mubr.bf16.gmra.mrb[0].mxu0 %v1572
  %v2859 = vpop.f32.mrb[0].mxu0
  %v2860 = vadd.f32 %v2820, %v2859
  %v2861 = vpop.f32.mrb[0].mxu0
  %v2862 = vpop.f32.mrb[0].mxu0
  %v2863 = vpop.f32.mrb[0].mxu0
  %2864 = vdwg.mxu0
  %2865 = vmatprep.subr.bf16.mxu0 0
  %2866 = vmatpush1.bf16.msra.mxu0 %v2505
  %2867 = vmatprep.subr.bf16.mxu0 0
  %2868 = vmatpush1.bf16.msra.mxu0 %v2506
  %2869 = vmatprep.subr.bf16.mxu0 0
  %2870 = vmatpush1.bf16.msra.mxu0 %v2507
  %2871 = vmatprep.subr.bf16.mxu0 0
  %2872 = vmatpush1.bf16.msra.mxu0 %v2508
  %2873 = vmatprep.subr.bf16.mxu0 0
  %2874 = vmatpush1.bf16.msra.mxu0 %v2509
  %2875 = vmatprep.subr.bf16.mxu0 0
  %2876 = vmatpush1.bf16.msra.mxu0 %v2510
  %2877 = vmatprep.subr.bf16.mxu0 0
  %2878 = vmatpush1.bf16.msra.mxu0 %v2511
  %2879 = vmatprep.subr.bf16.mxu0 0
  %2880 = vmatpush1.bf16.msra.mxu0 %v2512
  %2881 = vmatprep.subr.bf16.mxu0 0
  %2882 = vmatpush1.bf16.msra.mxu0 %v2513
  %2883 = vmatprep.subr.bf16.mxu0 0
  %2884 = vmatpush1.bf16.msra.mxu0 %v2514
  %2885 = vmatprep.subr.bf16.mxu0 0
  %2886 = vmatpush1.bf16.msra.mxu0 %v2515
  %2887 = vmatprep.subr.bf16.mxu0 0
  %2888 = vmatpush1.bf16.msra.mxu0 %v2516
  %2889 = vmatprep.subr.bf16.mxu0 0
  %2890 = vmatpush1.bf16.msra.mxu0 %v2517
  %2891 = vmatprep.subr.bf16.mxu0 0
  %2892 = vmatpush1.bf16.msra.mxu0 %v2518
  %2893 = vmatprep.subr.bf16.mxu0 0
  %2894 = vmatpush1.bf16.msra.mxu0 %v2519
  %2895 = vmatprep.subr.bf16.mxu0 0
  %2896 = vmatpush1.bf16.msra.mxu0 %v2520
  %2897 = vmatprep.mubr.bf16.mxu0 %v1575
  %2898 = vmatmul.mubr.bf16.gmra.mrb[0].mxu0 %v1574
  %v2899 = vpop.f32.mrb[0].mxu0
  %v2900 = vadd.f32 %v2860, %v2899
  %v2901 = vpop.f32.mrb[0].mxu0
  %v2902 = vpop.f32.mrb[0].mxu0
  %v2903 = vpop.f32.mrb[0].mxu0
  %2904 = vdwg.mxu0
  %2905 = vmatprep.subr.bf16.mxu0 0
  %2906 = vmatpush1.bf16.msra.mxu0 %v2521
  %2907 = vmatprep.subr.bf16.mxu0 0
  %2908 = vmatpush1.bf16.msra.mxu0 %v2522
  %2909 = vmatprep.subr.bf16.mxu0 0
  %2910 = vmatpush1.bf16.msra.mxu0 %v2523
  %2911 = vmatprep.subr.bf16.mxu0 0
  %2912 = vmatpush1.bf16.msra.mxu0 %v2524
  %2913 = vmatprep.subr.bf16.mxu0 0
  %2914 = vmatpush1.bf16.msra.mxu0 %v2525
  %2915 = vmatprep.subr.bf16.mxu0 0
  %2916 = vmatpush1.bf16.msra.mxu0 %v2526
  %2917 = vmatprep.subr.bf16.mxu0 0
  %2918 = vmatpush1.bf16.msra.mxu0 %v2527
  %2919 = vmatprep.subr.bf16.mxu0 0
  %2920 = vmatpush1.bf16.msra.mxu0 %v2528
  %2921 = vmatprep.subr.bf16.mxu0 0
  %2922 = vmatpush1.bf16.msra.mxu0 %v2529
  %2923 = vmatprep.subr.bf16.mxu0 0
  %2924 = vmatpush1.bf16.msra.mxu0 %v2530
  %2925 = vmatprep.subr.bf16.mxu0 0
  %2926 = vmatpush1.bf16.msra.mxu0 %v2531
  %2927 = vmatprep.subr.bf16.mxu0 0
  %2928 = vmatpush1.bf16.msra.mxu0 %v2532
  %2929 = vmatprep.subr.bf16.mxu0 0
  %2930 = vmatpush1.bf16.msra.mxu0 %v2533
  %2931 = vmatprep.subr.bf16.mxu0 0
  %2932 = vmatpush1.bf16.msra.mxu0 %v2534
  %2933 = vmatprep.subr.bf16.mxu0 0
  %2934 = vmatpush1.bf16.msra.mxu0 %v2535
  %2935 = vmatprep.subr.bf16.mxu0 0
  %2936 = vmatpush1.bf16.msra.mxu0 %v2536
  %2937 = vmatprep.mubr.bf16.mxu0 %v1577
  %2938 = vmatmul.mubr.bf16.gmra.mrb[0].mxu0 %v1576
  %v2939 = vpop.f32.mrb[0].mxu0
  %v2940 = vadd.f32 %v2900, %v2939
  %v2941 = vpop.f32.mrb[0].mxu0
  %v2942 = vpop.f32.mrb[0].mxu0
  %v2943 = vpop.f32.mrb[0].mxu0
  %2944 = vdwg.mxu0
  %2945 = vmatprep.subr.bf16.mxu0 0
  %2946 = vmatpush1.bf16.msra.mxu0 %v2537
  %2947 = vmatprep.subr.bf16.mxu0 0
  %2948 = vmatpush1.bf16.msra.mxu0 %v2538
  %2949 = vmatprep.subr.bf16.mxu0 0
  %2950 = vmatpush1.bf16.msra.mxu0 %v2539
  %2951 = vmatprep.subr.bf16.mxu0 0
  %2952 = vmatpush1.bf16.msra.mxu0 %v2540
  %2953 = vmatprep.subr.bf16.mxu0 0
  %2954 = vmatpush1.bf16.msra.mxu0 %v2541
  %2955 = vmatprep.subr.bf16.mxu0 0
  %2956 = vmatpush1.bf16.msra.mxu0 %v2542
  %2957 = vmatprep.subr.bf16.mxu0 0
  %2958 = vmatpush1.bf16.msra.mxu0 %v2543
  %2959 = vmatprep.subr.bf16.mxu0 0
  %2960 = vmatpush1.bf16.msra.mxu0 %v2544
  %2961 = vmatprep.subr.bf16.mxu0 0
  %2962 = vmatpush1.bf16.msra.mxu0 %v2545
  %2963 = vmatprep.subr.bf16.mxu0 0
  %2964 = vmatpush1.bf16.msra.mxu0 %v2546
  %2965 = vmatprep.subr.bf16.mxu0 0
  %2966 = vmatpush1.bf16.msra.mxu0 %v2547
  %2967 = vmatprep.subr.bf16.mxu0 0
  %2968 = vmatpush1.bf16.msra.mxu0 %v2548
  %2969 = vmatprep.subr.bf16.mxu0 0
  %2970 = vmatpush1.bf16.msra.mxu0 %v2549
  %2971 = vmatprep.subr.bf16.mxu0 0
  %2972 = vmatpush1.bf16.msra.mxu0 %v2550
  %2973 = vmatprep.subr.bf16.mxu0 0
  %2974 = vmatpush1.bf16.msra.mxu0 %v2551
  %2975 = vmatprep.subr.bf16.mxu0 0
  %2976 = vmatpush1.bf16.msra.mxu0 %v2552
  %2977 = vmatprep.mubr.bf16.mxu0 %v1579
  %2978 = vmatmul.mubr.bf16.gmra.mrb[0].mxu0 %v1578
  %v2979 = vpop.f32.mrb[0].mxu0
  %v2980 = vadd.f32 %v2940, %v2979
  %v2981 = vpop.f32.mrb[0].mxu0
  %v2982 = vpop.f32.mrb[0].mxu0
  %v2983 = vpop.f32.mrb[0].mxu0
  %2984 = vdwg.mxu0
  %2985 = vmatprep.subr.bf16.mxu0 0
  %2986 = vmatpush1.bf16.msra.mxu0 %v2553
  %2987 = vmatprep.subr.bf16.mxu0 0
  %2988 = vmatpush1.bf16.msra.mxu0 %v2554
  %2989 = vmatprep.subr.bf16.mxu0 0
  %2990 = vmatpush1.bf16.msra.mxu0 %v2555
  %2991 = vmatprep.subr.bf16.mxu0 0
  %2992 = vmatpush1.bf16.msra.mxu0 %v2556
  %2993 = vmatprep.subr.bf16.mxu0 0
  %2994 = vmatpush1.bf16.msra.mxu0 %v2557
  %2995 = vmatprep.subr.bf16.mxu0 0
  %2996 = vmatpush1.bf16.msra.mxu0 %v2558
  %2997 = vmatprep.subr.bf16.mxu0 0
  %2998 = vmatpush1.bf16.msra.mxu0 %v2559
  %2999 = vmatprep.subr.bf16.mxu0 0
  %3000 = vmatpush1.bf16.msra.mxu0 %v2560
  %3001 = vmatprep.subr.bf16.mxu0 0
  %3002 = vmatpush1.bf16.msra.mxu0 %v2561
  %3003 = vmatprep.subr.bf16.mxu0 0
  %3004 = vmatpush1.bf16.msra.mxu0 %v2562
  %3005 = vmatprep.subr.bf16.mxu0 0
  %3006 = vmatpush1.bf16.msra.mxu0 %v2563
  %3007 = vmatprep.subr.bf16.mxu0 0
  %3008 = vmatpush1.bf16.msra.mxu0 %v2564
  %3009 = vmatprep.subr.bf16.mxu0 0
  %3010 = vmatpush1.bf16.msra.mxu0 %v2565
  %3011 = vmatprep.subr.bf16.mxu0 0
  %3012 = vmatpush1.bf16.msra.mxu0 %v2566
  %3013 = vmatprep.subr.bf16.mxu0 0
  %3014 = vmatpush1.bf16.msra.mxu0 %v2567
  %3015 = vmatprep.subr.bf16.mxu0 0
  %3016 = vmatpush1.bf16.msra.mxu0 %v2568
  %3017 = vmatprep.mubr.bf16.mxu0 %v1581
  %3018 = vmatmul.mubr.bf16.gmra.mrb[0].mxu0 %v1580
  %v3019 = vpop.f32.mrb[0].mxu0
  %v3020 = vadd.f32 %v2980, %v3019
  %v3021 = vpop.f32.mrb[0].mxu0
  %v3022 = vpop.f32.mrb[0].mxu0
  %v3023 = vpop.f32.mrb[0].mxu0
  %3024 = vdwg.mxu0
  %3025 = vmatprep.subr.bf16.mxu0 0
  %3026 = vmatpush1.bf16.msra.mxu0 %v2569
  %3027 = vmatprep.subr.bf16.mxu0 0
  %3028 = vmatpush1.bf16.msra.mxu0 %v2570
  %3029 = vmatprep.subr.bf16.mxu0 0
  %3030 = vmatpush1.bf16.msra.mxu0 %v2571
  %3031 = vmatprep.subr.bf16.mxu0 0
  %3032 = vmatpush1.bf16.msra.mxu0 %v2572
  %3033 = vmatprep.subr.bf16.mxu0 0
  %3034 = vmatpush1.bf16.msra.mxu0 %v2573
  %3035 = vmatprep.subr.bf16.mxu0 0
  %3036 = vmatpush1.bf16.msra.mxu0 %v2574
  %3037 = vmatprep.subr.bf16.mxu0 0
  %3038 = vmatpush1.bf16.msra.mxu0 %v2575
  %3039 = vmatprep.subr.bf16.mxu0 0
  %3040 = vmatpush1.bf16.msra.mxu0 %v2576
  %3041 = vmatprep.subr.bf16.mxu0 0
  %3042 = vmatpush1.bf16.msra.mxu0 %v2577
  %3043 = vmatprep.subr.bf16.mxu0 0
  %3044 = vmatpush1.bf16.msra.mxu0 %v2578
  %3045 = vmatprep.subr.bf16.mxu0 0
  %3046 = vmatpush1.bf16.msra.mxu0 %v2579
  %3047 = vmatprep.subr.bf16.mxu0 0
  %3048 = vmatpush1.bf16.msra.mxu0 %v2580
  %3049 = vmatprep.subr.bf16.mxu0 0
  %3050 = vmatpush1.bf16.msra.mxu0 %v2581
  %3051 = vmatprep.subr.bf16.mxu0 0
  %3052 = vmatpush1.bf16.msra.mxu0 %v2582
  %3053 = vmatprep.subr.bf16.mxu0 0
  %3054 = vmatpush1.bf16.msra.mxu0 %v2583
  %3055 = vmatprep.subr.bf16.mxu0 0
  %3056 = vmatpush1.bf16.msra.mxu0 %v2584
  %3057 = vmatprep.mubr.bf16.mxu0 %v1583
  %3058 = vmatmul.mubr.bf16.gmra.mrb[0].mxu0 %v1582
  %v3059 = vpop.f32.mrb[0].mxu0
  %v3060 = vadd.f32 %v3020, %v3059
  %v3061 = vpop.f32.mrb[0].mxu0
  %v3062 = vpop.f32.mrb[0].mxu0
  %v3063 = vpop.f32.mrb[0].mxu0
  %3064 = vdwg.mxu0
  %3065 = vmatprep.subr.bf16.mxu0 0
  %3066 = vmatpush1.bf16.msra.mxu0 %v2585
  %3067 = vmatprep.subr.bf16.mxu0 0
  %3068 = vmatpush1.bf16.msra.mxu0 %v2586
  %3069 = vmatprep.subr.bf16.mxu0 0
  %3070 = vmatpush1.bf16.msra.mxu0 %v2587
  %3071 = vmatprep.subr.bf16.mxu0 0
  %3072 = vmatpush1.bf16.msra.mxu0 %v2588
  %3073 = vmatprep.subr.bf16.mxu0 0
  %3074 = vmatpush1.bf16.msra.mxu0 %v2589
  %3075 = vmatprep.subr.bf16.mxu0 0
  %3076 = vmatpush1.bf16.msra.mxu0 %v2590
  %3077 = vmatprep.subr.bf16.mxu0 0
  %3078 = vmatpush1.bf16.msra.mxu0 %v2591
  %3079 = vmatprep.subr.bf16.mxu0 0
  %3080 = vmatpush1.bf16.msra.mxu0 %v2592
  %3081 = vmatprep.subr.bf16.mxu0 0
  %3082 = vmatpush1.bf16.msra.mxu0 %v2593
  %3083 = vmatprep.subr.bf16.mxu0 0
  %3084 = vmatpush1.bf16.msra.mxu0 %v2594
  %3085 = vmatprep.subr.bf16.mxu0 0
  %3086 = vmatpush1.bf16.msra.mxu0 %v2595
  %3087 = vmatprep.subr.bf16.mxu0 0
  %3088 = vmatpush1.bf16.msra.mxu0 %v2596
  %3089 = vmatprep.subr.bf16.mxu0 0
  %3090 = vmatpush1.bf16.msra.mxu0 %v2597
  %3091 = vmatprep.subr.bf16.mxu0 0
  %3092 = vmatpush1.bf16.msra.mxu0 %v2598
  %3093 = vmatprep.subr.bf16.mxu0 0
  %3094 = vmatpush1.bf16.msra.mxu0 %v2599
  %3095 = vmatprep.subr.bf16.mxu0 0
  %3096 = vmatpush1.bf16.msra.mxu0 %v2600
  %3097 = vmatprep.mubr.bf16.mxu0 %v1585
  %3098 = vmatmul.mubr.bf16.gmra.mrb[0].mxu0 %v1584
  %v3099 = vpop.f32.mrb[0].mxu0
  %v3100 = vadd.f32 %v3060, %v3099
  %v3101 = vpop.f32.mrb[0].mxu0
  %v3102 = vpop.f32.mrb[0].mxu0
  %v3103 = vpop.f32.mrb[0].mxu0
  %3104 = vdwg.mxu0
  %v3105 = vmax.f32 %v3100, 0.0
  %v3106 = vld [vmem:[%s7] sm:$0xff]
  %v3107 = vld [vmem:[%s7 + $0x8] sm:$0xff]
  %v3108 = vld [vmem:[%s7 + $0x10] sm:$0xff]
  %v3109 = vld [vmem:[%s7 + $0x18] sm:$0xff]
  %v3110 = vld [vmem:[%s7 + $0x20] sm:$0xff]
  %v3111 = vld [vmem:[%s7 + $0x28] sm:$0xff]
  %v3112 = vld [vmem:[%s7 + $0x30] sm:$0xff]
  %v3113 = vld [vmem:[%s7 + $0x38] sm:$0xff]
  %v3114 = vld [vmem:[%s7 + $0x40] sm:$0xff]
  %v3115 = vld [vmem:[%s7 + $0x48] sm:$0xff]
  %v3116 = vld [vmem:[%s7 + $0x50] sm:$0xff]
  %v3117 = vld [vmem:[%s7 + $0x58] sm:$0xff]
  %v3118 = vld [vmem:[%s7 + $0x60] sm:$0xff]
  %v3119 = vld [vmem:[%s7 + $0x68] sm:$0xff]
  %v3120 = vld [vmem:[%s7 + $0x70] sm:$0xff]
  %v3121 = vld [vmem:[%s7 + $0x78] sm:$0xff]
  %v3122 = vld [vmem:[%s8] sm:$0x1]
  %v3124 = vlaneseq
  %v3125 = vshrl.u32 %v3124, 7
  %v3126 = vsub.s32 0, %v3125
  %v3127 = vrot.slane %v3122, %v3126
  %3129 = vmatprep.subr.mxu0 0.0
  %3130 = vmatpush1.msra.mxu0 %v3106
  %3131 = vmatprep.subr.mxu0 0.0
  %3132 = vmatpush1.msra.mxu0 %v3107
  %3133 = vmatprep.subr.mxu0 0.0
  %3134 = vmatpush1.msra.mxu0 %v3108
  %3135 = vmatprep.subr.mxu0 0.0
  %3136 = vmatpush1.msra.mxu0 %v3109
  %3137 = vmatprep.subr.mxu0 0.0
  %3138 = vmatpush1.msra.mxu0 %v3110
  %3139 = vmatprep.subr.mxu0 0.0
  %3140 = vmatpush1.msra.mxu0 %v3111
  %3141 = vmatprep.subr.mxu0 0.0
  %3142 = vmatpush1.msra.mxu0 %v3112
  %3143 = vmatprep.subr.mxu0 0.0
  %3144 = vmatpush1.msra.mxu0 %v3113
  %3145 = vmatprep.subr.mxu0 0.0
  %3146 = vmatpush1.msra.mxu0 %v3114
  %3147 = vmatprep.subr.mxu0 0.0
  %3148 = vmatpush1.msra.mxu0 %v3115
  %3149 = vmatprep.subr.mxu0 0.0
  %3150 = vmatpush1.msra.mxu0 %v3116
  %3151 = vmatprep.subr.mxu0 0.0
  %3152 = vmatpush1.msra.mxu0 %v3117
  %3153 = vmatprep.subr.mxu0 0.0
  %3154 = vmatpush1.msra.mxu0 %v3118
  %3155 = vmatprep.subr.mxu0 0.0
  %3156 = vmatpush1.msra.mxu0 %v3119
  %3157 = vmatprep.subr.mxu0 0.0
  %3158 = vmatpush1.msra.mxu0 %v3120
  %3159 = vmatprep.subr.mxu0 0.0
  %3160 = vmatpush1.msra.mxu0 %v3121
  %3161 = vmatprep.subr.mxu0 0.0
  %3162 = vmatpush1.msra.mxu0 0.0
  %3163 = vmatprep.subr.mxu0 0.0
  %3164 = vmatpush1.msra.mxu0 0.0
  %3165 = vmatprep.subr.mxu0 0.0
  %3166 = vmatpush1.msra.mxu0 0.0
  %3167 = vmatprep.subr.mxu0 0.0
  %3168 = vmatpush1.msra.mxu0 0.0
  %3169 = vmatprep.subr.mxu0 0.0
  %3170 = vmatpush1.msra.mxu0 0.0
  %3171 = vmatprep.subr.mxu0 0.0
  %3172 = vmatpush1.msra.mxu0 0.0
  %3173 = vmatprep.subr.mxu0 0.0
  %3174 = vmatpush1.msra.mxu0 0.0
  %3175 = vmatprep.subr.mxu0 0.0
  %3176 = vmatpush1.msra.mxu0 0.0
  %3177 = vmatprep.subr.mxu0 0.0
  %3178 = vmatpush1.msra.mxu0 0.0
  %3179 = vmatprep.subr.mxu0 0.0
  %3180 = vmatpush1.msra.mxu0 0.0
  %3181 = vmatprep.subr.mxu0 0.0
  %3182 = vmatpush1.msra.mxu0 0.0
  %3183 = vmatprep.subr.mxu0 0.0
  %3184 = vmatpush1.msra.mxu0 0.0
  %3185 = vmatprep.subr.mxu0 0.0
  %3186 = vmatpush1.msra.mxu0 0.0
  %3187 = vmatprep.subr.mxu0 0.0
  %3188 = vmatpush1.msra.mxu0 0.0
  %3189 = vmatprep.subr.mxu0 0.0
  %3190 = vmatpush1.msra.mxu0 0.0
  %3191 = vmatprep.subr.mxu0 0.0
  %3192 = vmatpush1.msra.mxu0 0.0
  %3193 = vmatprep.mubr.f32.mxu0 0.0
  %3194 = vmatmul.mubr.f32.gmra.mrb[0].mxu0 %v3105
  %v3195 = vpop.f32.mrb[0].mxu0
  %v3196 = vadd.f32 %v3127, %v3195
  %v3197 = vpop.f32.mrb[0].mxu0
  %3198 = vdwg.mxu0
  %3199 = vst [vmem:[%s10] sm:$0xff] %v3196
  // Predicated region
  $region38: #{mel_conv_net_forward.1} parent=0 // pred_check
    _
  $region39: #{mel_conv_net_forward.1} parent=0 // pred_check_branch
    %3201 = sbr.rel (0) target = $region41
  $region40: #{mel_conv_net_forward.1} parent=0 // pred_region
    _
  $region41: #{mel_conv_net_forward.1} parent=0 // pred_fallthru
    _
  // Predicated region
  $region42: #{mel_conv_net_forward.1} parent=0 // pred_check
    _
  $region43: #{mel_conv_net_forward.1} parent=0 // pred_check_branch
    %3203 = sbr.rel (0) target = $region45
  $region44: #{mel_conv_net_forward.1} parent=0 // pred_region
    _
  $region45: #{mel_conv_net_forward.1} parent=0 // pred_fallthru
    _
  // Predicated region
  $region46: #{mel_conv_net_forward.1} parent=0 // pred_check
    _
  $region47: #{mel_conv_net_forward.1} parent=0 // pred_check_branch
    %3205 = sbr.rel (0) target = $region49
  $region48: #{mel_conv_net_forward.1} parent=0 // pred_region
    _
  $region49: #{mel_conv_net_forward.1} parent=0 // pred_fallthru
    _
  // Predicated region
  $region50: #{mel_conv_net_forward.1} parent=0 // pred_check
    _
  $region51: #{mel_conv_net_forward.1} parent=0 // pred_check_branch
    %3207 = sbr.rel (0) target = $region53
  $region52: #{mel_conv_net_forward.1} parent=0 // pred_region
    _
  $region53: #{mel_conv_net_forward.1} parent=0 // pred_fallthru
    _

</llo_original>
